<compile_context>
chip_gen: v7x
topology: tpu7x:2x2x1
jax: 0.10.0
libtpu: 0.0.40
codegen_flags: <defaults>
</compile_context>

<pallas_src>
import functools

import jax
import jax.numpy as jnp
from jax.experimental import pallas as pl
from jax.experimental.pallas import tpu as pltpu


def _round_up(x, m):
    return ((x + m - 1) // m) * m


def _make_modulator_kernel(num_layers, out_dims, out_padded, freq_scale, freq_offset):
    """Builds a kernel closure for a fixed layer structure (static at trace time)."""

    def kernel(freq_ref, phase_ref, x_ref, *rest):
        # rest = (w0, b0, w1, b1, ..., w_{L-1}, b_{L-1}, out_ref)
        wb_refs = rest[: 2 * num_layers]
        out_ref = rest[2 * num_layers]

        x = x_ref[...]                                            # (TM, dim_in), already f32
        outs = []
        for l in range(num_layers):
            w = wb_refs[2 * l][...]                               # (in_l, out_l)
            b = wb_refs[2 * l + 1][...]                           # (1, out_l)
            h = jnp.dot(x, w, preferred_element_type=jnp.float32) + b
            # Per-layer FiLM remap (kept in the loop to avoid a large live (D,TM,W) temporary).
            f = freq_ref[l] * freq_scale + freq_offset            # (TM, out_l)
            x = jnp.sin(f * h + phase_ref[l])                     # FiLM: sin(freq*x + phase)
            outs.append(x)

        # Single lane-dense store: concat all layer outputs, pad to a multiple of 128 lanes.
        slab = jnp.concatenate(outs, axis=-1)                     # (TM, sum(out_dims))
        pad = out_padded - slab.shape[-1]
        if pad > 0:
            slab = jnp.concatenate(
                [slab, jnp.zeros((slab.shape[0], pad), slab.dtype)], axis=-1)
        out_ref[...] = slab.astype(out_ref.dtype)

    return kernel


def modulator_forward(x, frequencies, phase_shifts, weights, biases,
                      sin_w0=25.0, tm=2048):
    """Pallas implementation of Modulator.forward.

    x:            (N, dim_in) float32
    frequencies:  (D, N, W)   float32   (== feat_deform[0])
    phase_shifts: (D, N, W)   float32   (== feat_deform[1])
    weights[l]:   (in_l, out_l)
    biases[l]:    (1, out_l)
    returns:      (N, sum(out_l))
    """
    num_layers = len(weights)
    N, dim_in = x.shape
    D, Nf, W = frequencies.shape
    assert D == num_layers and Nf == N
    out_dims = tuple(w.shape[1] for w in weights)
    total_out = sum(out_dims)
    out_padded = _round_up(total_out, 128)        # lane-dense (unmasked) output store

    if sin_w0 > 15.0:
        freq_scale, freq_offset = 15.0, 30.0
    else:
        freq_scale, freq_offset = float(sin_w0), float(sin_w0) * 2.0

    # Batch tile: multiple of 8 (sublane), clamped so tiny inputs don't over-pad.
    tm = max(8, min(int(tm), _round_up(N, 8)))
    tm = _round_up(tm, 8)
    n_pad = _round_up(N, tm)
    grid = (n_pad // tm,)

    if n_pad != N:
        pad_n = n_pad - N
        x = jnp.pad(x, ((0, pad_n), (0, 0)))
        frequencies = jnp.pad(frequencies, ((0, 0), (0, pad_n), (0, 0)))
        phase_shifts = jnp.pad(phase_shifts, ((0, 0), (0, pad_n), (0, 0)))

    kernel = _make_modulator_kernel(num_layers, out_dims, out_padded,
                                    freq_scale, freq_offset)

    in_specs = [
        pl.BlockSpec((D, tm, W), lambda i: (0, i, 0)),   # frequencies
        pl.BlockSpec((D, tm, W), lambda i: (0, i, 0)),   # phase shifts
        pl.BlockSpec((tm, dim_in), lambda i: (i, 0)),    # input points
    ]
    operands = [frequencies, phase_shifts, x]
    for w, b in zip(weights, biases):
        in_specs.append(pl.BlockSpec(w.shape, lambda i: (0, 0)))   # full weight, resident
        in_specs.append(pl.BlockSpec(b.shape, lambda i: (0, 0)))   # full bias, resident
        operands.append(w)
        operands.append(b)

    out_spec = pl.BlockSpec((tm, out_padded), lambda i: (i, 0))

    # Explicit VMEM budget: pipelined tiles (x2 double-buffer w/ headroom) + resident params.
    block_bytes = 4 * tm * (2 * D * W + dim_in + out_padded)
    param_bytes = 4 * sum(int(w.size) + int(b.size) for w, b in zip(weights, biases))
    vmem_limit = int(2.5 * block_bytes) + 2 * param_bytes + (2 << 20)
    vmem_limit = min(max(vmem_limit, 16 << 20), 48 << 20)   # stay under v7x's 64 MiB physical

    fn = pl.pallas_call(
        kernel,
        out_shape=jax.ShapeDtypeStruct((n_pad, out_padded), jnp.float32),
        grid_spec=pltpu.PrefetchScalarGridSpec(
            num_scalar_prefetch=0,
            grid=grid,
            in_specs=in_specs,
            out_specs=out_spec,
        ),
        compiler_params=pltpu.CompilerParams(
            dimension_semantics=("parallel",),
            vmem_limit_bytes=vmem_limit,
        ),
    )
    out = fn(*operands)
    return out[:N, :total_out]


def modulator_reference(x, frequencies, phase_shifts, weights, biases, sin_w0=25.0):
    """Pure-JAX reference mirroring the PyTorch forward."""
    if sin_w0 > 15.0:
        freq = frequencies * 15.0 + 30.0
    else:
        freq = frequencies * sin_w0 + sin_w0 * 2.0
    outs = []
    h = x
    for l, (w, b) in enumerate(zip(weights, biases)):
        h = jnp.sin(freq[l] * (h @ w + b) + phase_shifts[l])
        outs.append(h)
    return jnp.concatenate(outs, axis=-1)


def init_modulator_params(key, dim_in, dim_out, D, W, sin_w0=25.0):
    """Deterministic synthetic init matching Modulator.__init__ shapes + sine_init bounds."""
    sin_dims = [dim_in] + [W] * (D - 1) + [dim_out]
    weights, biases = [], []
    for l in range(len(sin_dims) - 1):
        fan_in, fan_out = sin_dims[l], sin_dims[l + 1]
        key, kw, kb = jax.random.split(key, 3)
        bound_w = jnp.sqrt(6.0 / fan_in) / sin_w0          # sine_init bound
        bound_b = 1.0 / jnp.sqrt(fan_in)                   # torch Linear default bias init
        w = jax.random.uniform(kw, (fan_in, fan_out), jnp.float32, -bound_w, bound_w)
        b = jax.random.uniform(kb, (1, fan_out), jnp.float32, -bound_b, bound_b)
        weights.append(w)
        biases.append(b)
    return weights, biases


if __name__ == "__main__":
    # Small shapes implied by the module: Modulator(dim_in=4, dim_out=32, D=3, W=32)
    # -> 3 FiLM layers: 4->32, 32->32, 32->32; output concat = (N, 96)
    # N=20 is deliberately not a multiple of the tile to exercise the padding path.
    dim_in, dim_out, D, W, sin_w0 = 4, 32, 3, 32, 25.0
    N = 20

    key = jax.random.PRNGKey(0)
    key, kx, kf, kp = jax.random.split(key, 4)

    weights, biases = init_modulator_params(key, dim_in, dim_out, D, W, sin_w0)

    x = jax.random.normal(kx, (N, dim_in), jnp.float32)
    frequencies = jax.random.normal(kf, (D, N, W), jnp.float32)   # feat_deform[0]
    phase_shifts = jax.random.normal(kp, (D, N, W), jnp.float32)  # feat_deform[1]

    out = modulator_forward(x, frequencies, phase_shifts, weights, biases,
                            sin_w0=sin_w0, tm=2048)
    out = jax.block_until_ready(out)

    ref = modulator_reference(x, frequencies, phase_shifts, weights, biases, sin_w0=sin_w0)
    ref = jax.block_until_ready(ref)

    assert out.shape == (N, D * W), out.shape
    assert jnp.allclose(out, ref, atol=1e-5, rtol=1e-5), float(jnp.max(jnp.abs(out - ref)))

    print("KERNEL_OK")
</pallas_src>

<mosaic_0001>
module attributes {stable_mosaic.version = 11 : i64} {
  func.func @kernel(%arg0: i32, %arg1: memref<3x24x32xf32, #tpu.memory_space<vmem>>, %arg2: memref<3x24x32xf32, #tpu.memory_space<vmem>>, %arg3: memref<24x4xf32, #tpu.memory_space<vmem>>, %arg4: memref<4x32xf32, #tpu.memory_space<vmem>>, %arg5: memref<1x32xf32, #tpu.memory_space<vmem>>, %arg6: memref<32x32xf32, #tpu.memory_space<vmem>>, %arg7: memref<1x32xf32, #tpu.memory_space<vmem>>, %arg8: memref<32x32xf32, #tpu.memory_space<vmem>>, %arg9: memref<1x32xf32, #tpu.memory_space<vmem>>, %arg10: memref<24x128xf32, #tpu.memory_space<vmem>>) attributes {dimension_semantics = [#tpu.dimension_semantics<parallel>], iteration_bounds = array<i64: 1>, scalar_prefetch = 0 : i64, scratch_operands = 0 : i64, tpu.core_type = #tpu.core_type<tc>, window_params = [{transform_indices = @transform_0, window_bounds = array<i64: 3, 24, 32>}, {transform_indices = @transform_1, window_bounds = array<i64: 3, 24, 32>}, {transform_indices = @transform_2, window_bounds = array<i64: 24, 4>}, {pipeline_mode = #tpu.pipeline_mode<synchronous>, transform_indices = @transform_3, window_bounds = array<i64: 4, 32>}, {pipeline_mode = #tpu.pipeline_mode<synchronous>, transform_indices = @transform_4, window_bounds = array<i64: 1, 32>}, {pipeline_mode = #tpu.pipeline_mode<synchronous>, transform_indices = @transform_5, window_bounds = array<i64: 32, 32>}, {pipeline_mode = #tpu.pipeline_mode<synchronous>, transform_indices = @transform_6, window_bounds = array<i64: 1, 32>}, {pipeline_mode = #tpu.pipeline_mode<synchronous>, transform_indices = @transform_7, window_bounds = array<i64: 32, 32>}, {pipeline_mode = #tpu.pipeline_mode<synchronous>, transform_indices = @transform_8, window_bounds = array<i64: 1, 32>}, {transform_indices = @transform_9, window_bounds = array<i64: 24, 128>}]} {
    %c0 = arith.constant 0 : index
    %c0_0 = arith.constant 0 : index
    %0 = vector.load %arg3[%c0, %c0_0] : memref<24x4xf32, #tpu.memory_space<vmem>>, vector<24x4xf32>
    %c0_1 = arith.constant 0 : index
    %c0_2 = arith.constant 0 : index
    %1 = vector.load %arg4[%c0_1, %c0_2] : memref<4x32xf32, #tpu.memory_space<vmem>>, vector<4x32xf32>
    %c0_3 = arith.constant 0 : index
    %c0_4 = arith.constant 0 : index
    %2 = vector.load %arg5[%c0_3, %c0_4] : memref<1x32xf32, #tpu.memory_space<vmem>>, vector<1x32xf32>
    %cst = arith.constant dense<0.000000e+00> : vector<24x32xf32>
    %3 = tpu.matmul %0, %1, %cst {dimension_numbers = #tpu.dot_dimension_numbers<[1], [0], [0], [1], [0, 0, 1, 1], [], []>} : vector<24x4xf32>, vector<4x32xf32>, vector<24x32xf32> -> vector<24x32xf32>
    %4 = vector.broadcast %2 : vector<1x32xf32> to vector<24x32xf32>
    %5 = arith.addf %3, %4 : vector<24x32xf32>
    %c0_5 = arith.constant 0 : index
    %c0_6 = arith.constant 0 : index
    %c0_7 = arith.constant 0 : index
    %6 = vector.load %arg1[%c0_5, %c0_6, %c0_7] : memref<3x24x32xf32, #tpu.memory_space<vmem>>, vector<1x24x32xf32>
    %7 = vector.shape_cast %6 : vector<1x24x32xf32> to vector<24x32xf32>
    %cst_8 = arith.constant 1.500000e+01 : f32
    %8 = vector.broadcast %cst_8 : f32 to vector<24x32xf32>
    %9 = arith.mulf %7, %8 : vector<24x32xf32>
    %cst_9 = arith.constant 3.000000e+01 : f32
    %10 = vector.broadcast %cst_9 : f32 to vector<24x32xf32>
    %11 = arith.addf %9, %10 : vector<24x32xf32>
    %12 = arith.mulf %11, %5 : vector<24x32xf32>
    %c0_10 = arith.constant 0 : index
    %c0_11 = arith.constant 0 : index
    %c0_12 = arith.constant 0 : index
    %13 = vector.load %arg2[%c0_10, %c0_11, %c0_12] : memref<3x24x32xf32, #tpu.memory_space<vmem>>, vector<1x24x32xf32>
    %14 = vector.shape_cast %13 : vector<1x24x32xf32> to vector<24x32xf32>
    %15 = arith.addf %12, %14 : vector<24x32xf32>
    %16 = math.sin %15 : vector<24x32xf32>
    %c0_13 = arith.constant 0 : index
    %c0_14 = arith.constant 0 : index
    %17 = vector.load %arg6[%c0_13, %c0_14] : memref<32x32xf32, #tpu.memory_space<vmem>>, vector<32x32xf32>
    %c0_15 = arith.constant 0 : index
    %c0_16 = arith.constant 0 : index
    %18 = vector.load %arg7[%c0_15, %c0_16] : memref<1x32xf32, #tpu.memory_space<vmem>>, vector<1x32xf32>
    %cst_17 = arith.constant dense<0.000000e+00> : vector<24x32xf32>
    %19 = tpu.matmul %16, %17, %cst_17 {dimension_numbers = #tpu.dot_dimension_numbers<[1], [0], [0], [1], [0, 0, 1, 1], [], []>} : vector<24x32xf32>, vector<32x32xf32>, vector<24x32xf32> -> vector<24x32xf32>
    %20 = vector.broadcast %18 : vector<1x32xf32> to vector<24x32xf32>
    %21 = arith.addf %19, %20 : vector<24x32xf32>
    %c1 = arith.constant 1 : index
    %c0_18 = arith.constant 0 : index
    %c0_19 = arith.constant 0 : index
    %22 = vector.load %arg1[%c1, %c0_18, %c0_19] : memref<3x24x32xf32, #tpu.memory_space<vmem>>, vector<1x24x32xf32>
    %23 = vector.shape_cast %22 : vector<1x24x32xf32> to vector<24x32xf32>
    %cst_20 = arith.constant 1.500000e+01 : f32
    %24 = vector.broadcast %cst_20 : f32 to vector<24x32xf32>
    %25 = arith.mulf %23, %24 : vector<24x32xf32>
    %cst_21 = arith.constant 3.000000e+01 : f32
    %26 = vector.broadcast %cst_21 : f32 to vector<24x32xf32>
    %27 = arith.addf %25, %26 : vector<24x32xf32>
    %28 = arith.mulf %27, %21 : vector<24x32xf32>
    %c1_22 = arith.constant 1 : index
    %c0_23 = arith.constant 0 : index
    %c0_24 = arith.constant 0 : index
    %29 = vector.load %arg2[%c1_22, %c0_23, %c0_24] : memref<3x24x32xf32, #tpu.memory_space<vmem>>, vector<1x24x32xf32>
    %30 = vector.shape_cast %29 : vector<1x24x32xf32> to vector<24x32xf32>
    %31 = arith.addf %28, %30 : vector<24x32xf32>
    %32 = math.sin %31 : vector<24x32xf32>
    %c0_25 = arith.constant 0 : index
    %c0_26 = arith.constant 0 : index
    %33 = vector.load %arg8[%c0_25, %c0_26] : memref<32x32xf32, #tpu.memory_space<vmem>>, vector<32x32xf32>
    %c0_27 = arith.constant 0 : index
    %c0_28 = arith.constant 0 : index
    %34 = vector.load %arg9[%c0_27, %c0_28] : memref<1x32xf32, #tpu.memory_space<vmem>>, vector<1x32xf32>
    %cst_29 = arith.constant dense<0.000000e+00> : vector<24x32xf32>
    %35 = tpu.matmul %32, %33, %cst_29 {dimension_numbers = #tpu.dot_dimension_numbers<[1], [0], [0], [1], [0, 0, 1, 1], [], []>} : vector<24x32xf32>, vector<32x32xf32>, vector<24x32xf32> -> vector<24x32xf32>
    %36 = vector.broadcast %34 : vector<1x32xf32> to vector<24x32xf32>
    %37 = arith.addf %35, %36 : vector<24x32xf32>
    %c2 = arith.constant 2 : index
    %c0_30 = arith.constant 0 : index
    %c0_31 = arith.constant 0 : index
    %38 = vector.load %arg1[%c2, %c0_30, %c0_31] : memref<3x24x32xf32, #tpu.memory_space<vmem>>, vector<1x24x32xf32>
    %39 = vector.shape_cast %38 : vector<1x24x32xf32> to vector<24x32xf32>
    %cst_32 = arith.constant 1.500000e+01 : f32
    %40 = vector.broadcast %cst_32 : f32 to vector<24x32xf32>
    %41 = arith.mulf %39, %40 : vector<24x32xf32>
    %cst_33 = arith.constant 3.000000e+01 : f32
    %42 = vector.broadcast %cst_33 : f32 to vector<24x32xf32>
    %43 = arith.addf %41, %42 : vector<24x32xf32>
    %44 = arith.mulf %43, %37 : vector<24x32xf32>
    %c2_34 = arith.constant 2 : index
    %c0_35 = arith.constant 0 : index
    %c0_36 = arith.constant 0 : index
    %45 = vector.load %arg2[%c2_34, %c0_35, %c0_36] : memref<3x24x32xf32, #tpu.memory_space<vmem>>, vector<1x24x32xf32>
    %46 = vector.shape_cast %45 : vector<1x24x32xf32> to vector<24x32xf32>
    %47 = arith.addf %44, %46 : vector<24x32xf32>
    %48 = math.sin %47 : vector<24x32xf32>
    %49 = tpu.concatenate %16, %32, %48 in 1 : vector<24x32xf32>, vector<24x32xf32>, vector<24x32xf32> -> vector<24x96xf32>
    %cst_37 = arith.constant 0.000000e+00 : f32
    %50 = vector.broadcast %cst_37 : f32 to vector<24x32xf32>
    %51 = tpu.concatenate %49, %50 in 1 : vector<24x96xf32>, vector<24x32xf32> -> vector<24x128xf32>
    %c0_38 = arith.constant 0 : index
    %c0_39 = arith.constant 0 : index
    %52 = vector.load %arg10[%c0_38, %c0_39] : memref<24x128xf32, #tpu.memory_space<vmem>>, vector<24x128xf32>
    tpu.vector_store %arg10[%c0_38, %c0_39], %51 {strides = array<i32>} : memref<24x128xf32, #tpu.memory_space<vmem>>, vector<24x128xf32>,
    return
  }
  func.func @transform_0(%arg0: i32) -> (i32, i32, i32) {
    %c0_i32 = arith.constant 0 : i32
    %c0_i32_0 = arith.constant 0 : i32
    %c0_i32_1 = arith.constant 0 : i32
    return %c0_i32, %arg0, %c0_i32_0 : i32, i32, i32
  }
  func.func @transform_1(%arg0: i32) -> (i32, i32, i32) {
    %c0_i32 = arith.constant 0 : i32
    %c0_i32_0 = arith.constant 0 : i32
    %c0_i32_1 = arith.constant 0 : i32
    return %c0_i32, %arg0, %c0_i32_0 : i32, i32, i32
  }
  func.func @transform_2(%arg0: i32) -> (i32, i32) {
    %c0_i32 = arith.constant 0 : i32
    %c0_i32_0 = arith.constant 0 : i32
    return %arg0, %c0_i32 : i32, i32
  }
  func.func @transform_3(%arg0: i32) -> (i32, i32) {
    %c0_i32 = arith.constant 0 : i32
    %c0_i32_0 = arith.constant 0 : i32
    %c0_i32_1 = arith.constant 0 : i32
    return %c0_i32, %c0_i32_0 : i32, i32
  }
  func.func @transform_4(%arg0: i32) -> (i32, i32) {
    %c0_i32 = arith.constant 0 : i32
    %c0_i32_0 = arith.constant 0 : i32
    %c0_i32_1 = arith.constant 0 : i32
    return %c0_i32, %c0_i32_0 : i32, i32
  }
  func.func @transform_5(%arg0: i32) -> (i32, i32) {
    %c0_i32 = arith.constant 0 : i32
    %c0_i32_0 = arith.constant 0 : i32
    %c0_i32_1 = arith.constant 0 : i32
    return %c0_i32, %c0_i32_0 : i32, i32
  }
  func.func @transform_6(%arg0: i32) -> (i32, i32) {
    %c0_i32 = arith.constant 0 : i32
    %c0_i32_0 = arith.constant 0 : i32
    %c0_i32_1 = arith.constant 0 : i32
    return %c0_i32, %c0_i32_0 : i32, i32
  }
  func.func @transform_7(%arg0: i32) -> (i32, i32) {
    %c0_i32 = arith.constant 0 : i32
    %c0_i32_0 = arith.constant 0 : i32
    %c0_i32_1 = arith.constant 0 : i32
    return %c0_i32, %c0_i32_0 : i32, i32
  }
  func.func @transform_8(%arg0: i32) -> (i32, i32) {
    %c0_i32 = arith.constant 0 : i32
    %c0_i32_0 = arith.constant 0 : i32
    %c0_i32_1 = arith.constant 0 : i32
    return %c0_i32, %c0_i32_0 : i32, i32
  }
  func.func @transform_9(%arg0: i32) -> (i32, i32) {
    %c0_i32 = arith.constant 0 : i32
    %c0_i32_0 = arith.constant 0 : i32
    return %arg0, %c0_i32 : i32, i32
  }
}

</mosaic_0001>

<llo_original>
// kernel: tpu_custom_call.1
$region0: #{tpu_custom_call.1}
  #allocation0 [shape = 'u32[]', space=smem, size = 0x4, offset = 0x4, fixed_abs, tag = 'smem constant byte address 0x4 - core index']
  #allocation1 [shape = 'u32[144,128]{1,0:T(1,128)}', space=vmem, size = 0x12000, scoped, tag = 'internal scratch']
  %s0 = inlined_call_operand.hbm [shape: f32[3,24,32], index: 0, kind: input, shape index: {}]
  %s1 = inlined_call_operand.hbm [shape: f32[3,24,32], index: 1, kind: input, shape index: {}]
  %s2 = inlined_call_operand.vmem [shape: f32[24,4], index: 2, kind: input, shape index: {}]
  %s3 = inlined_call_operand.vmem [shape: f32[4,32], index: 3, kind: input, shape index: {}]
  %s4 = inlined_call_operand.vmem [shape: f32[1,32], index: 4, kind: input, shape index: {}]
  %s5 = inlined_call_operand.vmem [shape: f32[32,32], index: 5, kind: input, shape index: {}]
  %s6 = inlined_call_operand.vmem [shape: f32[1,32], index: 6, kind: input, shape index: {}]
  %s7 = inlined_call_operand.hbm [shape: f32[32,32], index: 7, kind: input, shape index: {}]
  %s8 = inlined_call_operand.vmem [shape: f32[1,32], index: 8, kind: input, shape index: {}]
  %s9 = inlined_call_operand.hbm [shape: f32[24,128], index: 9, kind: output, shape index: {}]
  %s10 = sld [smem:[#allocation0]]
  $region58: #{tpu_custom_call.1} parent=0
    _
  %s12 = ssub.s32 1, %s10
  %s13 = scalar_select 0, %s12, %s10
  $region1: #{tpu_custom_call.1} parent=0
    #allocation2 [shape = 'u8[36864]{0}', space=vmem, size = 0x9000, scoped, tag = 'input window, operand 0, single buffered']
    #allocation3 [shape = 's32[1]{0}', space=sflag, size = 0x4, scoped, tag = 'scoped memory for tpu_custom_call.1']
    #allocation4 [shape = 's32[1]{0}', space=sflag, size = 0x4, scoped, tag = 'scoped memory for tpu_custom_call.1']
    #allocation5 [shape = 'u8[36864]{0}', space=vmem, size = 0x9000, scoped, tag = 'input window, operand 1, single buffered']
    #allocation6 [shape = 's32[1]{0}', space=sflag, size = 0x4, scoped, tag = 'scoped memory for tpu_custom_call.1']
    #allocation7 [shape = 'u8[16384]{0}', space=vmem, size = 0x4000, scoped, tag = 'input window, operand 7, single buffered']
    #allocation8 [shape = 'u8[12288]{0}', space=vmem, size = 0x3000, scoped, tag = 'output window, operand 0, single buffered']
    %14 = vsyncpa [#allocation3], 0
    %15 = vsyncpa [#allocation6], 0
    %16 = vsyncpa [#allocation4], 0
    // Predicated region
    $region2: #{tpu_custom_call.1} parent=1 // pred_check
      _
    $region3: #{tpu_custom_call.1} parent=1 // pred_check_branch
      %18 = sbr.rel (0) target = $region5
    $region4: #{tpu_custom_call.1} parent=1 // pred_region
      %s20 = ssub.s32 1152, 1152
      %21 = vsyncadd [#allocation3], %s20
      %s22 = sshll.u32 [#allocation2], 4
      %s23 = int_to_ptr.vmem [resolvable:$true] %s22
      %28 = dma.hbm_to_vmem [thread:$0]  %s0, 1152, %s23, [#allocation3], 128, 128, 8
    $region5: #{tpu_custom_call.1} parent=1 // pred_fallthru
      _
    // Predicated region
    $region6: #{tpu_custom_call.1} parent=1 // pred_check
      _
    $region7: #{tpu_custom_call.1} parent=1 // pred_check_branch
      %30 = sbr.rel (0) target = $region9
    $region8: #{tpu_custom_call.1} parent=1 // pred_region
      %s32 = ssub.s32 1152, 1152
      %33 = vsyncadd [#allocation6], %s32
      %s34 = sshll.u32 [#allocation5], 4
      %s35 = int_to_ptr.vmem [resolvable:$true] %s34
      %40 = dma.hbm_to_vmem [thread:$0]  %s1, 1152, %s35, [#allocation6], 128, 128, 8
    $region9: #{tpu_custom_call.1} parent=1 // pred_fallthru
      _
    // Predicated region
    $region10: #{tpu_custom_call.1} parent=1 // pred_check
      _
    $region11: #{tpu_custom_call.1} parent=1 // pred_check_branch
      %42 = sbr.rel (0) target = $region13
    $region12: #{tpu_custom_call.1} parent=1 // pred_region
      _
    $region13: #{tpu_custom_call.1} parent=1 // pred_fallthru
      _
    // Predicated region
    $region14: #{tpu_custom_call.1} parent=1 // pred_check
      _
    $region15: #{tpu_custom_call.1} parent=1 // pred_check_branch
      %44 = sbr.rel (0) target = $region17
    $region16: #{tpu_custom_call.1} parent=1 // pred_region
      _
    $region17: #{tpu_custom_call.1} parent=1 // pred_fallthru
      _
    // Predicated region
    $region18: #{tpu_custom_call.1} parent=1 // pred_check
      _
    $region19: #{tpu_custom_call.1} parent=1 // pred_check_branch
      %46 = sbr.rel (0) target = $region21
    $region20: #{tpu_custom_call.1} parent=1 // pred_region
      _
    $region21: #{tpu_custom_call.1} parent=1 // pred_fallthru
      _
    // Predicated region
    $region22: #{tpu_custom_call.1} parent=1 // pred_check
      _
    $region23: #{tpu_custom_call.1} parent=1 // pred_check_branch
      %48 = sbr.rel (0) target = $region25
    $region24: #{tpu_custom_call.1} parent=1 // pred_region
      _
    $region25: #{tpu_custom_call.1} parent=1 // pred_fallthru
      _
    // Predicated region
    $region26: #{tpu_custom_call.1} parent=1 // pred_check
      _
    $region27: #{tpu_custom_call.1} parent=1 // pred_check_branch
      %50 = sbr.rel (0) target = $region29
    $region28: #{tpu_custom_call.1} parent=1 // pred_region
      _
    $region29: #{tpu_custom_call.1} parent=1 // pred_fallthru
      _
    // Predicated region
    $region30: #{tpu_custom_call.1} parent=1 // pred_check
      _
    $region31: #{tpu_custom_call.1} parent=1 // pred_check_branch
      %52 = sbr.rel (0) target = $region33
    $region32: #{tpu_custom_call.1} parent=1 // pred_region
      %s54 = ssub.s32 512, 512
      %55 = vsyncadd [#allocation6], %s54
      %s56 = sshll.u32 [#allocation7], 4
      %s57 = int_to_ptr.vmem [resolvable:$true] %s56
      %62 = dma.hbm_to_vmem [thread:$0]  %s7, 512, %s57, [#allocation6], 128, 128, 8
    $region33: #{tpu_custom_call.1} parent=1 // pred_fallthru
      _
    // Predicated region
    $region34: #{tpu_custom_call.1} parent=1 // pred_check
      _
    $region35: #{tpu_custom_call.1} parent=1 // pred_check_branch
      %64 = sbr.rel (0) target = $region37
    $region36: #{tpu_custom_call.1} parent=1 // pred_region
      _
    $region37: #{tpu_custom_call.1} parent=1 // pred_fallthru
      _
    // Predicated region
    $region38: #{tpu_custom_call.1} parent=1 // pred_check
      _
    $region39: #{tpu_custom_call.1} parent=1 // pred_check_branch
      %66 = sbr.rel (0) target = $region41
    $region40: #{tpu_custom_call.1} parent=1 // pred_region
      %67 = dma.done [#allocation3], 1152
    $region41: #{tpu_custom_call.1} parent=1 // pred_fallthru
      _
    // Predicated region
    $region42: #{tpu_custom_call.1} parent=1 // pred_check
      _
    $region43: #{tpu_custom_call.1} parent=1 // pred_check_branch
      %69 = sbr.rel (0) target = $region45
    $region44: #{tpu_custom_call.1} parent=1 // pred_region
      %70 = dma.done [#allocation6], 1152
    $region45: #{tpu_custom_call.1} parent=1 // pred_fallthru
      _
    // Predicated region
    $region46: #{tpu_custom_call.1} parent=1 // pred_check
      _
    $region47: #{tpu_custom_call.1} parent=1 // pred_check_branch
      %72 = sbr.rel (0) target = $region49
    $region48: #{tpu_custom_call.1} parent=1 // pred_region
      %73 = dma.done [#allocation6], 512
    $region49: #{tpu_custom_call.1} parent=1 // pred_fallthru
      _
    %v74 = vld [vmem:[%s2] sm:$0xff]
    %v75 = vld [vmem:[%s2 + $0x8] sm:$0xff]
    %v76 = vld [vmem:[%s2 + $0x10] sm:$0xff]
    %v77 = vld [vmem:[%s3] sm:$0xf]
    %v78 = vld [vmem:[%s4] sm:$0x1]
    %v80 = vlaneseq
    %v81 = vshrl.u32 %v80, 7
    %v82 = vsub.s32 0, %v81
    %v83 = vrot.slane %v78, %v82
    %vm85 = vcmask 31744
    %v87 = vsel %vm85, %v74, 0
    %v90 = vsel %vm85, %v75, 0
    %v93 = vsel %vm85, %v76, 0
    %vm95 = vcmask 1043456
    %v97 = vsel %vm95, %v77, 0
    %99 = vmatprep.subr.mxu0 0.0
    %100 = vmatpush1.msra.mxu0 %v97
    %101 = vmatprep.subr.mxu0 0.0
    %102 = vmatpush1.msra.mxu0 0.0
    %103 = vmatprep.subr.mxu0 0.0
    %104 = vmatpush1.msra.mxu0 0.0
    %105 = vmatprep.subr.mxu0 0.0
    %106 = vmatpush1.msra.mxu0 0.0
    %107 = vmatprep.subr.mxu0 0.0
    %108 = vmatpush1.msra.mxu0 0.0
    %109 = vmatprep.subr.mxu0 0.0
    %110 = vmatpush1.msra.mxu0 0.0
    %111 = vmatprep.subr.mxu0 0.0
    %112 = vmatpush1.msra.mxu0 0.0
    %113 = vmatprep.subr.mxu0 0.0
    %114 = vmatpush1.msra.mxu0 0.0
    %115 = vmatprep.subr.mxu0 0.0
    %116 = vmatpush1.msra.mxu0 0.0
    %117 = vmatprep.subr.mxu0 0.0
    %118 = vmatpush1.msra.mxu0 0.0
    %119 = vmatprep.subr.mxu0 0.0
    %120 = vmatpush1.msra.mxu0 0.0
    %121 = vmatprep.subr.mxu0 0.0
    %122 = vmatpush1.msra.mxu0 0.0
    %123 = vmatprep.subr.mxu0 0.0
    %124 = vmatpush1.msra.mxu0 0.0
    %125 = vmatprep.subr.mxu0 0.0
    %126 = vmatpush1.msra.mxu0 0.0
    %127 = vmatprep.subr.mxu0 0.0
    %128 = vmatpush1.msra.mxu0 0.0
    %129 = vmatprep.subr.mxu0 0.0
    %130 = vmatpush1.msra.mxu0 0.0
    %131 = vmatprep.subr.mxu0 0.0
    %132 = vmatpush1.msra.mxu0 0.0
    %133 = vmatprep.subr.mxu0 0.0
    %134 = vmatpush1.msra.mxu0 0.0
    %135 = vmatprep.subr.mxu0 0.0
    %136 = vmatpush1.msra.mxu0 0.0
    %137 = vmatprep.subr.mxu0 0.0
    %138 = vmatpush1.msra.mxu0 0.0
    %139 = vmatprep.subr.mxu0 0.0
    %140 = vmatpush1.msra.mxu0 0.0
    %141 = vmatprep.subr.mxu0 0.0
    %142 = vmatpush1.msra.mxu0 0.0
    %143 = vmatprep.subr.mxu0 0.0
    %144 = vmatpush1.msra.mxu0 0.0
    %145 = vmatprep.subr.mxu0 0.0
    %146 = vmatpush1.msra.mxu0 0.0
    %147 = vmatprep.subr.mxu0 0.0
    %148 = vmatpush1.msra.mxu0 0.0
    %149 = vmatprep.subr.mxu0 0.0
    %150 = vmatpush1.msra.mxu0 0.0
    %151 = vmatprep.subr.mxu0 0.0
    %152 = vmatpush1.msra.mxu0 0.0
    %153 = vmatprep.subr.mxu0 0.0
    %154 = vmatpush1.msra.mxu0 0.0
    %155 = vmatprep.subr.mxu0 0.0
    %156 = vmatpush1.msra.mxu0 0.0
    %157 = vmatprep.subr.mxu0 0.0
    %158 = vmatpush1.msra.mxu0 0.0
    %159 = vmatprep.subr.mxu0 0.0
    %160 = vmatpush1.msra.mxu0 0.0
    %161 = vmatprep.subr.mxu0 0.0
    %162 = vmatpush1.msra.mxu0 0.0
    %163 = vmatprep.mubr.f32.mxu0 0.0
    %164 = vmatmul.mubr.f32.gmra.mrb[0].mxu0 %v87
    %v165 = vpop.f32.mrb[0].mxu0
    %v166 = vadd.f32 %v83, %v165
    %v167 = vpop.f32.mrb[0].mxu0
    %168 = vmatprep.mubr.f32.mxu0 0.0
    %169 = vmatmul.mubr.f32.gmra.mrb[0].mxu0 %v90
    %v170 = vpop.f32.mrb[0].mxu0
    %v171 = vadd.f32 %v83, %v170
    %v172 = vpop.f32.mrb[0].mxu0
    %173 = vmatprep.mubr.f32.mxu0 0.0
    %174 = vmatmul.mubr.f32.gmra.mrb[0].mxu0 %v93
    %v175 = vpop.f32.mrb[0].mxu0
    %v176 = vadd.f32 %v83, %v175
    %v177 = vpop.f32.mrb[0].mxu0
    %178 = vdwg.mxu0
    %v179 = vld [vmem:[#allocation2] sm:$0xff]
    %v180 = vld [vmem:[#allocation2 + $0x8] sm:$0xff]
    %v181 = vld [vmem:[#allocation2 + $0x10] sm:$0xff]
    %v182 = vmul.f32 %v179, 15.0
    %v183 = vmul.f32 %v180, 15.0
    %v184 = vmul.f32 %v181, 15.0
    %v185 = vadd.f32 %v182, 30.0
    %v186 = vadd.f32 %v183, 30.0
    %v187 = vadd.f32 %v184, 30.0
    %v188 = vmul.f32 %v185, %v166
    %v189 = vmul.f32 %v186, %v171
    %v190 = vmul.f32 %v187, %v176
    %v191 = vld [vmem:[#allocation5] sm:$0xff]
    %v192 = vld [vmem:[#allocation5 + $0x8] sm:$0xff]
    %v193 = vld [vmem:[#allocation5 + $0x10] sm:$0xff]
    %v194 = vadd.f32 %v188, %v191
    %v195 = vadd.f32 %v189, %v192
    %v196 = vadd.f32 %v190, %v193
    %v197 = vand.u32 2147483647, %v194
    %vm198 = vcmp.le.f32.partialorder %v197, 0.7853982
    %vm199 = vcmp.lt.s32.totalorder %v194, 0
    %v200 = vand.u32 %v194, 2139095040
    %v201 = vshrl.u32 %v200, 23
    %v202 = vsub.s32 %v201, 127
    %v203 = vand.u32 2147483647, %v194
    %v204 = vand.u32 %v203, 8388607
    %v205 = vor.u32 %v204, 8388608
    %v206 = vsub.s32 0, %v205
    %v207 = vadd.s32 %v202, 1
    %vm208 = vcmp.gt.s32.totalorder %v207, 0
    %v209 = vsel %vm208, %v207, 0
    %v210 = vshrl.u32 %v209, 5
    %v211 = vand.u32 %v209, 31
    %v212 = vsub.s32 32, %v211
    %v213 = vshrl.u32 683565275, %v212
    %v214 = vshll.u32 683565275, %v211
    %v215 = vshrl.u32 2475754826, %v212
    %v216 = vor.u32 %v214, %v215
    %v217 = vshll.u32 2475754826, %v211
    %v218 = vshrl.u32 2131351028, %v212
    %v219 = vor.u32 %v217, %v218
    %v220 = vshll.u32 2131351028, %v211
    %v221 = vshrl.u32 2102212464, %v212
    %v222 = vor.u32 %v220, %v221
    %v223 = vshll.u32 2102212464, %v211
    %v224 = vshrl.u32 920167782, %v212
    %v225 = vor.u32 %v223, %v224
    %v226 = vshll.u32 920167782, %v211
    %v227 = vshrl.u32 1326507024, %v212
    %v228 = vor.u32 %v226, %v227
    %vm229 = vcmp.lt.s32.totalorder %v210, 1
    %vm230 = vcmp.lt.s32.totalorder %v210, 2
    %vm231 = vcmp.lt.s32.totalorder %v210, 3
    %vm232 = vcmp.lt.s32.totalorder %v210, 4
    %v233 = vsel %vm229, %v213, %v216
    %v234 = vsel %vm232, %v222, 2102212464
    %v235 = vsel %vm231, %v219, %v234
    %v236 = vsel %vm230, %v233, %v235
    %v237 = vsel %vm229, %v216, %v219
    %v238 = vsel %vm232, %v225, 920167782
    %v239 = vsel %vm231, %v222, %v238
    %v240 = vsel %vm230, %v237, %v239
    %v241 = vsel %vm229, %v219, %v222
    %v242 = vsel %vm232, %v228, 1326507024
    %v243 = vsel %vm231, %v225, %v242
    %v244 = vsel %vm230, %v241, %v243
    %v245 = vshll.u32 %v205, 8
    %v246 = vmul.u32.u64.compose %v245, %v244
    %v247 = vextract.low.u32 %v246
    %v248 = vextract.high.u32 %v246
    %v249 = vmul.u32.u64.compose %v245, %v240
    %v250 = vextract.low.u32 %v249
    %v251 = vextract.high.u32 %v249
    %v252 = vmul.u32 %v245, %v236
    %v253 = vadd.s32 %v248, %v250
    %vm254 = vc.u32 %v248, %v250
    %v255 = vadd.s32 %v251, 1
    %v256 = vsel %vm254, %v255, %v251
    %v257 = vadd.s32 %v252, %v256
    %v258 = vadd.s32 %v257, 536870912
    %v259 = vshrl.u32 %v258, 30
    %v260 = vshll.u32 %v259, 30
    %v261 = vsub.s32 %v257, %v260
    %vm262 = vcmp.lt.s32.totalorder %v261, 0
    %v263 = vsub.s32 0, %v261
    %v264 = vsel %vm262, %v263, %v261
    %v265 = vclz %v264
    %v266 = vsub.s32 %v265, 2
    %vm267 = vcmp.gt.s32.totalorder 0, %v266
    %v268 = vsel %vm267, 0, %v266
    %v269 = vsub.s32 32, %v268
    %v270 = vshll.u32 %v261, %v268
    %v271 = vshrl.u32 %v253, %v269
    %v272 = vor.u32 %v270, %v271
    %v273 = vsub.s32 4294967266, %v268
    %v274 = vadd.s32 %v273, 127
    %v275 = vshll.u32 %v274, 23
    %v276 = vor.u32 4788187, %v275
    %v277 = vand.u32 2147483647, %v276
    %v279 = vcvt.s32.f32 %v272
    %v280 = vmul.f32 %v279, %v277
    %v281 = vxor.u32 %v280, 2147483648
    %v282 = vsel %vm199, %v281, %v280
    %v283 = vsub.s32 4, %v259
    %v284 = vsel %vm199, %v283, %v259
    %v285 = vsel %vm198, %v194, %v282
    %v286 = vsel %vm198, 0, %v284
    %v287 = vcosq.f32.pop %v285
    %v288 = vsinq.f32.pop %v285
    %vm289 = vweird.f32 %v194
    %v290 = vadd.s32 %v286, 3
    %v291 = vand.u32 %v290, 3
    %vm292 = vcmp.lt.s32.totalorder %v291, 2
    %vm293 = vcmp.eq.s32.totalorder %v291, 0
    %v294 = vxor.u32 %v288, 2147483648
    %v295 = vsel %vm293, %v287, %v294
    %vm296 = vcmp.eq.s32.totalorder %v291, 2
    %v297 = vxor.u32 %v287, 2147483648
    %v298 = vsel %vm296, %v297, %v288
    %v299 = vsel %vm292, %v295, %v298
    %v300 = vsel %vm289, nan, %v299
    %v301 = vand.u32 2147483647, %v195
    %vm302 = vcmp.le.f32.partialorder %v301, 0.7853982
    %vm303 = vcmp.lt.s32.totalorder %v195, 0
    %v304 = vand.u32 %v195, 2139095040
    %v305 = vshrl.u32 %v304, 23
    %v306 = vsub.s32 %v305, 127
    %v307 = vand.u32 2147483647, %v195
    %v308 = vand.u32 %v307, 8388607
    %v309 = vor.u32 %v308, 8388608
    %v310 = vsub.s32 0, %v309
    %v311 = vadd.s32 %v306, 1
    %vm312 = vcmp.gt.s32.totalorder %v311, 0
    %v313 = vsel %vm312, %v311, 0
    %v314 = vshrl.u32 %v313, 5
    %v315 = vand.u32 %v313, 31
    %v316 = vsub.s32 32, %v315
    %v317 = vshrl.u32 683565275, %v316
    %v318 = vshll.u32 683565275, %v315
    %v319 = vshrl.u32 2475754826, %v316
    %v320 = vor.u32 %v318, %v319
    %v321 = vshll.u32 2475754826, %v315
    %v322 = vshrl.u32 2131351028, %v316
    %v323 = vor.u32 %v321, %v322
    %v324 = vshll.u32 2131351028, %v315
    %v325 = vshrl.u32 2102212464, %v316
    %v326 = vor.u32 %v324, %v325
    %v327 = vshll.u32 2102212464, %v315
    %v328 = vshrl.u32 920167782, %v316
    %v329 = vor.u32 %v327, %v328
    %v330 = vshll.u32 920167782, %v315
    %v331 = vshrl.u32 1326507024, %v316
    %v332 = vor.u32 %v330, %v331
    %vm333 = vcmp.lt.s32.totalorder %v314, 1
    %vm334 = vcmp.lt.s32.totalorder %v314, 2
    %vm335 = vcmp.lt.s32.totalorder %v314, 3
    %vm336 = vcmp.lt.s32.totalorder %v314, 4
    %v337 = vsel %vm333, %v317, %v320
    %v338 = vsel %vm336, %v326, 2102212464
    %v339 = vsel %vm335, %v323, %v338
    %v340 = vsel %vm334, %v337, %v339
    %v341 = vsel %vm333, %v320, %v323
    %v342 = vsel %vm336, %v329, 920167782
    %v343 = vsel %vm335, %v326, %v342
    %v344 = vsel %vm334, %v341, %v343
    %v345 = vsel %vm333, %v323, %v326
    %v346 = vsel %vm336, %v332, 1326507024
    %v347 = vsel %vm335, %v329, %v346
    %v348 = vsel %vm334, %v345, %v347
    %v349 = vshll.u32 %v309, 8
    %v350 = vmul.u32.u64.compose %v349, %v348
    %v351 = vextract.low.u32 %v350
    %v352 = vextract.high.u32 %v350
    %v353 = vmul.u32.u64.compose %v349, %v344
    %v354 = vextract.low.u32 %v353
    %v355 = vextract.high.u32 %v353
    %v356 = vmul.u32 %v349, %v340
    %v357 = vadd.s32 %v352, %v354
    %vm358 = vc.u32 %v352, %v354
    %v359 = vadd.s32 %v355, 1
    %v360 = vsel %vm358, %v359, %v355
    %v361 = vadd.s32 %v356, %v360
    %v362 = vadd.s32 %v361, 536870912
    %v363 = vshrl.u32 %v362, 30
    %v364 = vshll.u32 %v363, 30
    %v365 = vsub.s32 %v361, %v364
    %vm366 = vcmp.lt.s32.totalorder %v365, 0
    %v367 = vsub.s32 0, %v365
    %v368 = vsel %vm366, %v367, %v365
    %v369 = vclz %v368
    %v370 = vsub.s32 %v369, 2
    %vm371 = vcmp.gt.s32.totalorder 0, %v370
    %v372 = vsel %vm371, 0, %v370
    %v373 = vsub.s32 32, %v372
    %v374 = vshll.u32 %v365, %v372
    %v375 = vshrl.u32 %v357, %v373
    %v376 = vor.u32 %v374, %v375
    %v377 = vsub.s32 4294967266, %v372
    %v378 = vadd.s32 %v377, 127
    %v379 = vshll.u32 %v378, 23
    %v380 = vor.u32 4788187, %v379
    %v381 = vand.u32 2147483647, %v380
    %v383 = vcvt.s32.f32 %v376
    %v384 = vmul.f32 %v383, %v381
    %v385 = vxor.u32 %v384, 2147483648
    %v386 = vsel %vm303, %v385, %v384
    %v387 = vsub.s32 4, %v363
    %v388 = vsel %vm303, %v387, %v363
    %v389 = vsel %vm302, %v195, %v386
    %v390 = vsel %vm302, 0, %v388
    %v391 = vcosq.f32.pop %v389
    %v392 = vsinq.f32.pop %v389
    %vm393 = vweird.f32 %v195
    %v394 = vadd.s32 %v390, 3
    %v395 = vand.u32 %v394, 3
    %vm396 = vcmp.lt.s32.totalorder %v395, 2
    %vm397 = vcmp.eq.s32.totalorder %v395, 0
    %v398 = vxor.u32 %v392, 2147483648
    %v399 = vsel %vm397, %v391, %v398
    %vm400 = vcmp.eq.s32.totalorder %v395, 2
    %v401 = vxor.u32 %v391, 2147483648
    %v402 = vsel %vm400, %v401, %v392
    %v403 = vsel %vm396, %v399, %v402
    %v404 = vsel %vm393, nan, %v403
    %v405 = vand.u32 2147483647, %v196
    %vm406 = vcmp.le.f32.partialorder %v405, 0.7853982
    %vm407 = vcmp.lt.s32.totalorder %v196, 0
    %v408 = vand.u32 %v196, 2139095040
    %v409 = vshrl.u32 %v408, 23
    %v410 = vsub.s32 %v409, 127
    %v411 = vand.u32 2147483647, %v196
    %v412 = vand.u32 %v411, 8388607
    %v413 = vor.u32 %v412, 8388608
    %v414 = vsub.s32 0, %v413
    %v415 = vadd.s32 %v410, 1
    %vm416 = vcmp.gt.s32.totalorder %v415, 0
    %v417 = vsel %vm416, %v415, 0
    %v418 = vshrl.u32 %v417, 5
    %v419 = vand.u32 %v417, 31
    %v420 = vsub.s32 32, %v419
    %v421 = vshrl.u32 683565275, %v420
    %v422 = vshll.u32 683565275, %v419
    %v423 = vshrl.u32 2475754826, %v420
    %v424 = vor.u32 %v422, %v423
    %v425 = vshll.u32 2475754826, %v419
    %v426 = vshrl.u32 2131351028, %v420
    %v427 = vor.u32 %v425, %v426
    %v428 = vshll.u32 2131351028, %v419
    %v429 = vshrl.u32 2102212464, %v420
    %v430 = vor.u32 %v428, %v429
    %v431 = vshll.u32 2102212464, %v419
    %v432 = vshrl.u32 920167782, %v420
    %v433 = vor.u32 %v431, %v432
    %v434 = vshll.u32 920167782, %v419
    %v435 = vshrl.u32 1326507024, %v420
    %v436 = vor.u32 %v434, %v435
    %vm437 = vcmp.lt.s32.totalorder %v418, 1
    %vm438 = vcmp.lt.s32.totalorder %v418, 2
    %vm439 = vcmp.lt.s32.totalorder %v418, 3
    %vm440 = vcmp.lt.s32.totalorder %v418, 4
    %v441 = vsel %vm437, %v421, %v424
    %v442 = vsel %vm440, %v430, 2102212464
    %v443 = vsel %vm439, %v427, %v442
    %v444 = vsel %vm438, %v441, %v443
    %v445 = vsel %vm437, %v424, %v427
    %v446 = vsel %vm440, %v433, 920167782
    %v447 = vsel %vm439, %v430, %v446
    %v448 = vsel %vm438, %v445, %v447
    %v449 = vsel %vm437, %v427, %v430
    %v450 = vsel %vm440, %v436, 1326507024
    %v451 = vsel %vm439, %v433, %v450
    %v452 = vsel %vm438, %v449, %v451
    %v453 = vshll.u32 %v413, 8
    %v454 = vmul.u32.u64.compose %v453, %v452
    %v455 = vextract.low.u32 %v454
    %v456 = vextract.high.u32 %v454
    %v457 = vmul.u32.u64.compose %v453, %v448
    %v458 = vextract.low.u32 %v457
    %v459 = vextract.high.u32 %v457
    %v460 = vmul.u32 %v453, %v444
    %v461 = vadd.s32 %v456, %v458
    %vm462 = vc.u32 %v456, %v458
    %v463 = vadd.s32 %v459, 1
    %v464 = vsel %vm462, %v463, %v459
    %v465 = vadd.s32 %v460, %v464
    %v466 = vadd.s32 %v465, 536870912
    %v467 = vshrl.u32 %v466, 30
    %v468 = vshll.u32 %v467, 30
    %v469 = vsub.s32 %v465, %v468
    %vm470 = vcmp.lt.s32.totalorder %v469, 0
    %v471 = vsub.s32 0, %v469
    %v472 = vsel %vm470, %v471, %v469
    %v473 = vclz %v472
    %v474 = vsub.s32 %v473, 2
    %vm475 = vcmp.gt.s32.totalorder 0, %v474
    %v476 = vsel %vm475, 0, %v474
    %v477 = vsub.s32 32, %v476
    %v478 = vshll.u32 %v469, %v476
    %v479 = vshrl.u32 %v461, %v477
    %v480 = vor.u32 %v478, %v479
    %v481 = vsub.s32 4294967266, %v476
    %v482 = vadd.s32 %v481, 127
    %v483 = vshll.u32 %v482, 23
    %v484 = vor.u32 4788187, %v483
    %v485 = vand.u32 2147483647, %v484
    %v487 = vcvt.s32.f32 %v480
    %v488 = vmul.f32 %v487, %v485
    %v489 = vxor.u32 %v488, 2147483648
    %v490 = vsel %vm407, %v489, %v488
    %v491 = vsub.s32 4, %v467
    %v492 = vsel %vm407, %v491, %v467
    %v493 = vsel %vm406, %v196, %v490
    %v494 = vsel %vm406, 0, %v492
    %v495 = vcosq.f32.pop %v493
    %v496 = vsinq.f32.pop %v493
    %vm497 = vweird.f32 %v196
    %v498 = vadd.s32 %v494, 3
    %v499 = vand.u32 %v498, 3
    %vm500 = vcmp.lt.s32.totalorder %v499, 2
    %vm501 = vcmp.eq.s32.totalorder %v499, 0
    %v502 = vxor.u32 %v496, 2147483648
    %v503 = vsel %vm501, %v495, %v502
    %vm504 = vcmp.eq.s32.totalorder %v499, 2
    %v505 = vxor.u32 %v495, 2147483648
    %v506 = vsel %vm504, %v505, %v496
    %v507 = vsel %vm500, %v503, %v506
    %v508 = vsel %vm497, nan, %v507
    %v509 = vld [vmem:[%s5] sm:$0xff]
    %v510 = vld [vmem:[%s5 + $0x8] sm:$0xff]
    %v511 = vld [vmem:[%s5 + $0x10] sm:$0xff]
    %v512 = vld [vmem:[%s5 + $0x18] sm:$0xff]
    %v513 = vld [vmem:[%s6] sm:$0x1]
    %v515 = vlaneseq
    %v516 = vshrl.u32 %v515, 7
    %v517 = vsub.s32 0, %v516
    %v518 = vrot.slane %v513, %v517
    %vm520 = vcmask 261120
    %v522 = vsel %vm520, %v300, 0
    %v525 = vsel %vm520, %v404, 0
    %v528 = vsel %vm520, %v508, 0
    %530 = vmatprep.subr.mxu0 0.0
    %531 = vmatpush1.msra.mxu0 %v509
    %532 = vmatprep.subr.mxu0 0.0
    %533 = vmatpush1.msra.mxu0 %v510
    %534 = vmatprep.subr.mxu0 0.0
    %535 = vmatpush1.msra.mxu0 %v511
    %536 = vmatprep.subr.mxu0 0.0
    %537 = vmatpush1.msra.mxu0 %v512
    %538 = vmatprep.subr.mxu0 0.0
    %539 = vmatpush1.msra.mxu0 0.0
    %540 = vmatprep.subr.mxu0 0.0
    %541 = vmatpush1.msra.mxu0 0.0
    %542 = vmatprep.subr.mxu0 0.0
    %543 = vmatpush1.msra.mxu0 0.0
    %544 = vmatprep.subr.mxu0 0.0
    %545 = vmatpush1.msra.mxu0 0.0
    %546 = vmatprep.subr.mxu0 0.0
    %547 = vmatpush1.msra.mxu0 0.0
    %548 = vmatprep.subr.mxu0 0.0
    %549 = vmatpush1.msra.mxu0 0.0
    %550 = vmatprep.subr.mxu0 0.0
    %551 = vmatpush1.msra.mxu0 0.0
    %552 = vmatprep.subr.mxu0 0.0
    %553 = vmatpush1.msra.mxu0 0.0
    %554 = vmatprep.subr.mxu0 0.0
    %555 = vmatpush1.msra.mxu0 0.0
    %556 = vmatprep.subr.mxu0 0.0
    %557 = vmatpush1.msra.mxu0 0.0
    %558 = vmatprep.subr.mxu0 0.0
    %559 = vmatpush1.msra.mxu0 0.0
    %560 = vmatprep.subr.mxu0 0.0
    %561 = vmatpush1.msra.mxu0 0.0
    %562 = vmatprep.subr.mxu0 0.0
    %563 = vmatpush1.msra.mxu0 0.0
    %564 = vmatprep.subr.mxu0 0.0
    %565 = vmatpush1.msra.mxu0 0.0
    %566 = vmatprep.subr.mxu0 0.0
    %567 = vmatpush1.msra.mxu0 0.0
    %568 = vmatprep.subr.mxu0 0.0
    %569 = vmatpush1.msra.mxu0 0.0
    %570 = vmatprep.subr.mxu0 0.0
    %571 = vmatpush1.msra.mxu0 0.0
    %572 = vmatprep.subr.mxu0 0.0
    %573 = vmatpush1.msra.mxu0 0.0
    %574 = vmatprep.subr.mxu0 0.0
    %575 = vmatpush1.msra.mxu0 0.0
    %576 = vmatprep.subr.mxu0 0.0
    %577 = vmatpush1.msra.mxu0 0.0
    %578 = vmatprep.subr.mxu0 0.0
    %579 = vmatpush1.msra.mxu0 0.0
    %580 = vmatprep.subr.mxu0 0.0
    %581 = vmatpush1.msra.mxu0 0.0
    %582 = vmatprep.subr.mxu0 0.0
    %583 = vmatpush1.msra.mxu0 0.0
    %584 = vmatprep.subr.mxu0 0.0
    %585 = vmatpush1.msra.mxu0 0.0
    %586 = vmatprep.subr.mxu0 0.0
    %587 = vmatpush1.msra.mxu0 0.0
    %588 = vmatprep.subr.mxu0 0.0
    %589 = vmatpush1.msra.mxu0 0.0
    %590 = vmatprep.subr.mxu0 0.0
    %591 = vmatpush1.msra.mxu0 0.0
    %592 = vmatprep.subr.mxu0 0.0
    %593 = vmatpush1.msra.mxu0 0.0
    %594 = vmatprep.mubr.f32.mxu0 0.0
    %595 = vmatmul.mubr.f32.gmra.mrb[0].mxu0 %v522
    %v596 = vpop.f32.mrb[0].mxu0
    %v597 = vadd.f32 %v518, %v596
    %v598 = vpop.f32.mrb[0].mxu0
    %599 = vmatprep.mubr.f32.mxu0 0.0
    %600 = vmatmul.mubr.f32.gmra.mrb[0].mxu0 %v525
    %v601 = vpop.f32.mrb[0].mxu0
    %v602 = vadd.f32 %v518, %v601
    %v603 = vpop.f32.mrb[0].mxu0
    %604 = vmatprep.mubr.f32.mxu0 0.0
    %605 = vmatmul.mubr.f32.gmra.mrb[0].mxu0 %v528
    %v606 = vpop.f32.mrb[0].mxu0
    %v607 = vadd.f32 %v518, %v606
    %v608 = vpop.f32.mrb[0].mxu0
    %609 = vdwg.mxu0
    %s610 = scalar_lea.vmem [#allocation2], 24
    %v611 = vld [vmem:[%s610] sm:$0xff]
    %v612 = vld [vmem:[%s610 + $0x8] sm:$0xff]
    %v613 = vld [vmem:[%s610 + $0x10] sm:$0xff]
    %v614 = vmul.f32 %v611, 15.0
    %v615 = vmul.f32 %v612, 15.0
    %v616 = vmul.f32 %v613, 15.0
    %v617 = vadd.f32 %v614, 30.0
    %v618 = vadd.f32 %v615, 30.0
    %v619 = vadd.f32 %v616, 30.0
    %v620 = vmul.f32 %v617, %v597
    %v621 = vmul.f32 %v618, %v602
    %v622 = vmul.f32 %v619, %v607
    %s623 = scalar_lea.vmem [#allocation5], 24
    %v624 = vld [vmem:[%s623] sm:$0xff]
    %v625 = vld [vmem:[%s623 + $0x8] sm:$0xff]
    %v626 = vld [vmem:[%s623 + $0x10] sm:$0xff]
    %v627 = vadd.f32 %v620, %v624
    %v628 = vadd.f32 %v621, %v625
    %v629 = vadd.f32 %v622, %v626
    %v630 = vand.u32 2147483647, %v627
    %vm631 = vcmp.le.f32.partialorder %v630, 0.7853982
    %vm632 = vcmp.lt.s32.totalorder %v627, 0
    %v633 = vand.u32 %v627, 2139095040
    %v634 = vshrl.u32 %v633, 23
    %v635 = vsub.s32 %v634, 127
    %v636 = vand.u32 2147483647, %v627
    %v637 = vand.u32 %v636, 8388607
    %v638 = vor.u32 %v637, 8388608
    %v639 = vsub.s32 0, %v638
    %v640 = vadd.s32 %v635, 1
    %vm641 = vcmp.gt.s32.totalorder %v640, 0
    %v642 = vsel %vm641, %v640, 0
    %v643 = vshrl.u32 %v642, 5
    %v644 = vand.u32 %v642, 31
    %v645 = vsub.s32 32, %v644
    %v646 = vshrl.u32 683565275, %v645
    %v647 = vshll.u32 683565275, %v644
    %v648 = vshrl.u32 2475754826, %v645
    %v649 = vor.u32 %v647, %v648
    %v650 = vshll.u32 2475754826, %v644
    %v651 = vshrl.u32 2131351028, %v645
    %v652 = vor.u32 %v650, %v651
    %v653 = vshll.u32 2131351028, %v644
    %v654 = vshrl.u32 2102212464, %v645
    %v655 = vor.u32 %v653, %v654
    %v656 = vshll.u32 2102212464, %v644
    %v657 = vshrl.u32 920167782, %v645
    %v658 = vor.u32 %v656, %v657
    %v659 = vshll.u32 920167782, %v644
    %v660 = vshrl.u32 1326507024, %v645
    %v661 = vor.u32 %v659, %v660
    %vm662 = vcmp.lt.s32.totalorder %v643, 1
    %vm663 = vcmp.lt.s32.totalorder %v643, 2
    %vm664 = vcmp.lt.s32.totalorder %v643, 3
    %vm665 = vcmp.lt.s32.totalorder %v643, 4
    %v666 = vsel %vm662, %v646, %v649
    %v667 = vsel %vm665, %v655, 2102212464
    %v668 = vsel %vm664, %v652, %v667
    %v669 = vsel %vm663, %v666, %v668
    %v670 = vsel %vm662, %v649, %v652
    %v671 = vsel %vm665, %v658, 920167782
    %v672 = vsel %vm664, %v655, %v671
    %v673 = vsel %vm663, %v670, %v672
    %v674 = vsel %vm662, %v652, %v655
    %v675 = vsel %vm665, %v661, 1326507024
    %v676 = vsel %vm664, %v658, %v675
    %v677 = vsel %vm663, %v674, %v676
    %v678 = vshll.u32 %v638, 8
    %v679 = vmul.u32.u64.compose %v678, %v677
    %v680 = vextract.low.u32 %v679
    %v681 = vextract.high.u32 %v679
    %v682 = vmul.u32.u64.compose %v678, %v673
    %v683 = vextract.low.u32 %v682
    %v684 = vextract.high.u32 %v682
    %v685 = vmul.u32 %v678, %v669
    %v686 = vadd.s32 %v681, %v683
    %vm687 = vc.u32 %v681, %v683
    %v688 = vadd.s32 %v684, 1
    %v689 = vsel %vm687, %v688, %v684
    %v690 = vadd.s32 %v685, %v689
    %v691 = vadd.s32 %v690, 536870912
    %v692 = vshrl.u32 %v691, 30
    %v693 = vshll.u32 %v692, 30
    %v694 = vsub.s32 %v690, %v693
    %vm695 = vcmp.lt.s32.totalorder %v694, 0
    %v696 = vsub.s32 0, %v694
    %v697 = vsel %vm695, %v696, %v694
    %v698 = vclz %v697
    %v699 = vsub.s32 %v698, 2
    %vm700 = vcmp.gt.s32.totalorder 0, %v699
    %v701 = vsel %vm700, 0, %v699
    %v702 = vsub.s32 32, %v701
    %v703 = vshll.u32 %v694, %v701
    %v704 = vshrl.u32 %v686, %v702
    %v705 = vor.u32 %v703, %v704
    %v706 = vsub.s32 4294967266, %v701
    %v707 = vadd.s32 %v706, 127
    %v708 = vshll.u32 %v707, 23
    %v709 = vor.u32 4788187, %v708
    %v710 = vand.u32 2147483647, %v709
    %v712 = vcvt.s32.f32 %v705
    %v713 = vmul.f32 %v712, %v710
    %v714 = vxor.u32 %v713, 2147483648
    %v715 = vsel %vm632, %v714, %v713
    %v716 = vsub.s32 4, %v692
    %v717 = vsel %vm632, %v716, %v692
    %v718 = vsel %vm631, %v627, %v715
    %v719 = vsel %vm631, 0, %v717
    %v720 = vcosq.f32.pop %v718
    %v721 = vsinq.f32.pop %v718
    %vm722 = vweird.f32 %v627
    %v723 = vadd.s32 %v719, 3
    %v724 = vand.u32 %v723, 3
    %vm725 = vcmp.lt.s32.totalorder %v724, 2
    %vm726 = vcmp.eq.s32.totalorder %v724, 0
    %v727 = vxor.u32 %v721, 2147483648
    %v728 = vsel %vm726, %v720, %v727
    %vm729 = vcmp.eq.s32.totalorder %v724, 2
    %v730 = vxor.u32 %v720, 2147483648
    %v731 = vsel %vm729, %v730, %v721
    %v732 = vsel %vm725, %v728, %v731
    %v733 = vsel %vm722, nan, %v732
    %v734 = vand.u32 2147483647, %v628
    %vm735 = vcmp.le.f32.partialorder %v734, 0.7853982
    %vm736 = vcmp.lt.s32.totalorder %v628, 0
    %v737 = vand.u32 %v628, 2139095040
    %v738 = vshrl.u32 %v737, 23
    %v739 = vsub.s32 %v738, 127
    %v740 = vand.u32 2147483647, %v628
    %v741 = vand.u32 %v740, 8388607
    %v742 = vor.u32 %v741, 8388608
    %v743 = vsub.s32 0, %v742
    %v744 = vadd.s32 %v739, 1
    %vm745 = vcmp.gt.s32.totalorder %v744, 0
    %v746 = vsel %vm745, %v744, 0
    %v747 = vshrl.u32 %v746, 5
    %v748 = vand.u32 %v746, 31
    %v749 = vsub.s32 32, %v748
    %v750 = vshrl.u32 683565275, %v749
    %v751 = vshll.u32 683565275, %v748
    %v752 = vshrl.u32 2475754826, %v749
    %v753 = vor.u32 %v751, %v752
    %v754 = vshll.u32 2475754826, %v748
    %v755 = vshrl.u32 2131351028, %v749
    %v756 = vor.u32 %v754, %v755
    %v757 = vshll.u32 2131351028, %v748
    %v758 = vshrl.u32 2102212464, %v749
    %v759 = vor.u32 %v757, %v758
    %v760 = vshll.u32 2102212464, %v748
    %v761 = vshrl.u32 920167782, %v749
    %v762 = vor.u32 %v760, %v761
    %v763 = vshll.u32 920167782, %v748
    %v764 = vshrl.u32 1326507024, %v749
    %v765 = vor.u32 %v763, %v764
    %vm766 = vcmp.lt.s32.totalorder %v747, 1
    %vm767 = vcmp.lt.s32.totalorder %v747, 2
    %vm768 = vcmp.lt.s32.totalorder %v747, 3
    %vm769 = vcmp.lt.s32.totalorder %v747, 4
    %v770 = vsel %vm766, %v750, %v753
    %v771 = vsel %vm769, %v759, 2102212464
    %v772 = vsel %vm768, %v756, %v771
    %v773 = vsel %vm767, %v770, %v772
    %v774 = vsel %vm766, %v753, %v756
    %v775 = vsel %vm769, %v762, 920167782
    %v776 = vsel %vm768, %v759, %v775
    %v777 = vsel %vm767, %v774, %v776
    %v778 = vsel %vm766, %v756, %v759
    %v779 = vsel %vm769, %v765, 1326507024
    %v780 = vsel %vm768, %v762, %v779
    %v781 = vsel %vm767, %v778, %v780
    %v782 = vshll.u32 %v742, 8
    %v783 = vmul.u32.u64.compose %v782, %v781
    %v784 = vextract.low.u32 %v783
    %v785 = vextract.high.u32 %v783
    %v786 = vmul.u32.u64.compose %v782, %v777
    %v787 = vextract.low.u32 %v786
    %v788 = vextract.high.u32 %v786
    %v789 = vmul.u32 %v782, %v773
    %v790 = vadd.s32 %v785, %v787
    %vm791 = vc.u32 %v785, %v787
    %v792 = vadd.s32 %v788, 1
    %v793 = vsel %vm791, %v792, %v788
    %v794 = vadd.s32 %v789, %v793
    %v795 = vadd.s32 %v794, 536870912
    %v796 = vshrl.u32 %v795, 30
    %v797 = vshll.u32 %v796, 30
    %v798 = vsub.s32 %v794, %v797
    %vm799 = vcmp.lt.s32.totalorder %v798, 0
    %v800 = vsub.s32 0, %v798
    %v801 = vsel %vm799, %v800, %v798
    %v802 = vclz %v801
    %v803 = vsub.s32 %v802, 2
    %vm804 = vcmp.gt.s32.totalorder 0, %v803
    %v805 = vsel %vm804, 0, %v803
    %v806 = vsub.s32 32, %v805
    %v807 = vshll.u32 %v798, %v805
    %v808 = vshrl.u32 %v790, %v806
    %v809 = vor.u32 %v807, %v808
    %v810 = vsub.s32 4294967266, %v805
    %v811 = vadd.s32 %v810, 127
    %v812 = vshll.u32 %v811, 23
    %v813 = vor.u32 4788187, %v812
    %v814 = vand.u32 2147483647, %v813
    %v816 = vcvt.s32.f32 %v809
    %v817 = vmul.f32 %v816, %v814
    %v818 = vxor.u32 %v817, 2147483648
    %v819 = vsel %vm736, %v818, %v817
    %v820 = vsub.s32 4, %v796
    %v821 = vsel %vm736, %v820, %v796
    %v822 = vsel %vm735, %v628, %v819
    %v823 = vsel %vm735, 0, %v821
    %v824 = vcosq.f32.pop %v822
    %v825 = vsinq.f32.pop %v822
    %vm826 = vweird.f32 %v628
    %v827 = vadd.s32 %v823, 3
    %v828 = vand.u32 %v827, 3
    %vm829 = vcmp.lt.s32.totalorder %v828, 2
    %vm830 = vcmp.eq.s32.totalorder %v828, 0
    %v831 = vxor.u32 %v825, 2147483648
    %v832 = vsel %vm830, %v824, %v831
    %vm833 = vcmp.eq.s32.totalorder %v828, 2
    %v834 = vxor.u32 %v824, 2147483648
    %v835 = vsel %vm833, %v834, %v825
    %v836 = vsel %vm829, %v832, %v835
    %v837 = vsel %vm826, nan, %v836
    %v838 = vand.u32 2147483647, %v629
    %vm839 = vcmp.le.f32.partialorder %v838, 0.7853982
    %vm840 = vcmp.lt.s32.totalorder %v629, 0
    %v841 = vand.u32 %v629, 2139095040
    %v842 = vshrl.u32 %v841, 23
    %v843 = vsub.s32 %v842, 127
    %v844 = vand.u32 2147483647, %v629
    %v845 = vand.u32 %v844, 8388607
    %v846 = vor.u32 %v845, 8388608
    %v847 = vsub.s32 0, %v846
    %v848 = vadd.s32 %v843, 1
    %vm849 = vcmp.gt.s32.totalorder %v848, 0
    %v850 = vsel %vm849, %v848, 0
    %v851 = vshrl.u32 %v850, 5
    %v852 = vand.u32 %v850, 31
    %v853 = vsub.s32 32, %v852
    %v854 = vshrl.u32 683565275, %v853
    %v855 = vshll.u32 683565275, %v852
    %v856 = vshrl.u32 2475754826, %v853
    %v857 = vor.u32 %v855, %v856
    %v858 = vshll.u32 2475754826, %v852
    %v859 = vshrl.u32 2131351028, %v853
    %v860 = vor.u32 %v858, %v859
    %v861 = vshll.u32 2131351028, %v852
    %v862 = vshrl.u32 2102212464, %v853
    %v863 = vor.u32 %v861, %v862
    %v864 = vshll.u32 2102212464, %v852
    %v865 = vshrl.u32 920167782, %v853
    %v866 = vor.u32 %v864, %v865
    %v867 = vshll.u32 920167782, %v852
    %v868 = vshrl.u32 1326507024, %v853
    %v869 = vor.u32 %v867, %v868
    %vm870 = vcmp.lt.s32.totalorder %v851, 1
    %vm871 = vcmp.lt.s32.totalorder %v851, 2
    %vm872 = vcmp.lt.s32.totalorder %v851, 3
    %vm873 = vcmp.lt.s32.totalorder %v851, 4
    %v874 = vsel %vm870, %v854, %v857
    %v875 = vsel %vm873, %v863, 2102212464
    %v876 = vsel %vm872, %v860, %v875
    %v877 = vsel %vm871, %v874, %v876
    %v878 = vsel %vm870, %v857, %v860
    %v879 = vsel %vm873, %v866, 920167782
    %v880 = vsel %vm872, %v863, %v879
    %v881 = vsel %vm871, %v878, %v880
    %v882 = vsel %vm870, %v860, %v863
    %v883 = vsel %vm873, %v869, 1326507024
    %v884 = vsel %vm872, %v866, %v883
    %v885 = vsel %vm871, %v882, %v884
    %v886 = vshll.u32 %v846, 8
    %v887 = vmul.u32.u64.compose %v886, %v885
    %v888 = vextract.low.u32 %v887
    %v889 = vextract.high.u32 %v887
    %v890 = vmul.u32.u64.compose %v886, %v881
    %v891 = vextract.low.u32 %v890
    %v892 = vextract.high.u32 %v890
    %v893 = vmul.u32 %v886, %v877
    %v894 = vadd.s32 %v889, %v891
    %vm895 = vc.u32 %v889, %v891
    %v896 = vadd.s32 %v892, 1
    %v897 = vsel %vm895, %v896, %v892
    %v898 = vadd.s32 %v893, %v897
    %v899 = vadd.s32 %v898, 536870912
    %v900 = vshrl.u32 %v899, 30
    %v901 = vshll.u32 %v900, 30
    %v902 = vsub.s32 %v898, %v901
    %vm903 = vcmp.lt.s32.totalorder %v902, 0
    %v904 = vsub.s32 0, %v902
    %v905 = vsel %vm903, %v904, %v902
    %v906 = vclz %v905
    %v907 = vsub.s32 %v906, 2
    %vm908 = vcmp.gt.s32.totalorder 0, %v907
    %v909 = vsel %vm908, 0, %v907
    %v910 = vsub.s32 32, %v909
    %v911 = vshll.u32 %v902, %v909
    %v912 = vshrl.u32 %v894, %v910
    %v913 = vor.u32 %v911, %v912
    %v914 = vsub.s32 4294967266, %v909
    %v915 = vadd.s32 %v914, 127
    %v916 = vshll.u32 %v915, 23
    %v917 = vor.u32 4788187, %v916
    %v918 = vand.u32 2147483647, %v917
    %v920 = vcvt.s32.f32 %v913
    %v921 = vmul.f32 %v920, %v918
    %v922 = vxor.u32 %v921, 2147483648
    %v923 = vsel %vm840, %v922, %v921
    %v924 = vsub.s32 4, %v900
    %v925 = vsel %vm840, %v924, %v900
    %v926 = vsel %vm839, %v629, %v923
    %v927 = vsel %vm839, 0, %v925
    %v928 = vcosq.f32.pop %v926
    %v929 = vsinq.f32.pop %v926
    %vm930 = vweird.f32 %v629
    %v931 = vadd.s32 %v927, 3
    %v932 = vand.u32 %v931, 3
    %vm933 = vcmp.lt.s32.totalorder %v932, 2
    %vm934 = vcmp.eq.s32.totalorder %v932, 0
    %v935 = vxor.u32 %v929, 2147483648
    %v936 = vsel %vm934, %v928, %v935
    %vm937 = vcmp.eq.s32.totalorder %v932, 2
    %v938 = vxor.u32 %v928, 2147483648
    %v939 = vsel %vm937, %v938, %v929
    %v940 = vsel %vm933, %v936, %v939
    %v941 = vsel %vm930, nan, %v940
    %v942 = vld [vmem:[#allocation7] sm:$0xff]
    %v943 = vld [vmem:[#allocation7 + $0x8] sm:$0xff]
    %v944 = vld [vmem:[#allocation7 + $0x10] sm:$0xff]
    %v945 = vld [vmem:[#allocation7 + $0x18] sm:$0xff]
    %v946 = vld [vmem:[%s8] sm:$0x1]
    %v948 = vlaneseq
    %v949 = vshrl.u32 %v948, 7
    %v950 = vsub.s32 0, %v949
    %v951 = vrot.slane %v946, %v950
    %v954 = vsel %vm520, %v733, 0
    %v957 = vsel %vm520, %v837, 0
    %v960 = vsel %vm520, %v941, 0
    %962 = vmatprep.subr.mxu0 0.0
    %963 = vmatpush1.msra.mxu0 %v942
    %964 = vmatprep.subr.mxu0 0.0
    %965 = vmatpush1.msra.mxu0 %v943
    %966 = vmatprep.subr.mxu0 0.0
    %967 = vmatpush1.msra.mxu0 %v944
    %968 = vmatprep.subr.mxu0 0.0
    %969 = vmatpush1.msra.mxu0 %v945
    %970 = vmatprep.subr.mxu0 0.0
    %971 = vmatpush1.msra.mxu0 0.0
    %972 = vmatprep.subr.mxu0 0.0
    %973 = vmatpush1.msra.mxu0 0.0
    %974 = vmatprep.subr.mxu0 0.0
    %975 = vmatpush1.msra.mxu0 0.0
    %976 = vmatprep.subr.mxu0 0.0
    %977 = vmatpush1.msra.mxu0 0.0
    %978 = vmatprep.subr.mxu0 0.0
    %979 = vmatpush1.msra.mxu0 0.0
    %980 = vmatprep.subr.mxu0 0.0
    %981 = vmatpush1.msra.mxu0 0.0
    %982 = vmatprep.subr.mxu0 0.0
    %983 = vmatpush1.msra.mxu0 0.0
    %984 = vmatprep.subr.mxu0 0.0
    %985 = vmatpush1.msra.mxu0 0.0
    %986 = vmatprep.subr.mxu0 0.0
    %987 = vmatpush1.msra.mxu0 0.0
    %988 = vmatprep.subr.mxu0 0.0
    %989 = vmatpush1.msra.mxu0 0.0
    %990 = vmatprep.subr.mxu0 0.0
    %991 = vmatpush1.msra.mxu0 0.0
    %992 = vmatprep.subr.mxu0 0.0
    %993 = vmatpush1.msra.mxu0 0.0
    %994 = vmatprep.subr.mxu0 0.0
    %995 = vmatpush1.msra.mxu0 0.0
    %996 = vmatprep.subr.mxu0 0.0
    %997 = vmatpush1.msra.mxu0 0.0
    %998 = vmatprep.subr.mxu0 0.0
    %999 = vmatpush1.msra.mxu0 0.0
    %1000 = vmatprep.subr.mxu0 0.0
    %1001 = vmatpush1.msra.mxu0 0.0
    %1002 = vmatprep.subr.mxu0 0.0
    %1003 = vmatpush1.msra.mxu0 0.0
    %1004 = vmatprep.subr.mxu0 0.0
    %1005 = vmatpush1.msra.mxu0 0.0
    %1006 = vmatprep.subr.mxu0 0.0
    %1007 = vmatpush1.msra.mxu0 0.0
    %1008 = vmatprep.subr.mxu0 0.0
    %1009 = vmatpush1.msra.mxu0 0.0
    %1010 = vmatprep.subr.mxu0 0.0
    %1011 = vmatpush1.msra.mxu0 0.0
    %1012 = vmatprep.subr.mxu0 0.0
    %1013 = vmatpush1.msra.mxu0 0.0
    %1014 = vmatprep.subr.mxu0 0.0
    %1015 = vmatpush1.msra.mxu0 0.0
    %1016 = vmatprep.subr.mxu0 0.0
    %1017 = vmatpush1.msra.mxu0 0.0
    %1018 = vmatprep.subr.mxu0 0.0
    %1019 = vmatpush1.msra.mxu0 0.0
    %1020 = vmatprep.subr.mxu0 0.0
    %1021 = vmatpush1.msra.mxu0 0.0
    %1022 = vmatprep.subr.mxu0 0.0
    %1023 = vmatpush1.msra.mxu0 0.0
    %1024 = vmatprep.subr.mxu0 0.0
    %1025 = vmatpush1.msra.mxu0 0.0
    %1026 = vmatprep.mubr.f32.mxu0 0.0
    %1027 = vmatmul.mubr.f32.gmra.mrb[0].mxu0 %v954
    %v1028 = vpop.f32.mrb[0].mxu0
    %v1029 = vadd.f32 %v951, %v1028
    %v1030 = vpop.f32.mrb[0].mxu0
    %1031 = vmatprep.mubr.f32.mxu0 0.0
    %1032 = vmatmul.mubr.f32.gmra.mrb[0].mxu0 %v957
    %v1033 = vpop.f32.mrb[0].mxu0
    %v1034 = vadd.f32 %v951, %v1033
    %v1035 = vpop.f32.mrb[0].mxu0
    %1036 = vmatprep.mubr.f32.mxu0 0.0
    %1037 = vmatmul.mubr.f32.gmra.mrb[0].mxu0 %v960
    %v1038 = vpop.f32.mrb[0].mxu0
    %v1039 = vadd.f32 %v951, %v1038
    %v1040 = vpop.f32.mrb[0].mxu0
    %1041 = vdwg.mxu0
    %s1042 = scalar_lea.vmem [#allocation2], 48
    %v1043 = vld [vmem:[%s1042] sm:$0xff]
    %v1044 = vld [vmem:[%s1042 + $0x8] sm:$0xff]
    %v1045 = vld [vmem:[%s1042 + $0x10] sm:$0xff]
    %v1046 = vmul.f32 %v1043, 15.0
    %v1047 = vmul.f32 %v1044, 15.0
    %v1048 = vmul.f32 %v1045, 15.0
    %v1049 = vadd.f32 %v1046, 30.0
    %v1050 = vadd.f32 %v1047, 30.0
    %v1051 = vadd.f32 %v1048, 30.0
    %v1052 = vmul.f32 %v1049, %v1029
    %v1053 = vmul.f32 %v1050, %v1034
    %v1054 = vmul.f32 %v1051, %v1039
    %s1055 = scalar_lea.vmem [#allocation5], 48
    %v1056 = vld [vmem:[%s1055] sm:$0xff]
    %v1057 = vld [vmem:[%s1055 + $0x8] sm:$0xff]
    %v1058 = vld [vmem:[%s1055 + $0x10] sm:$0xff]
    %v1059 = vadd.f32 %v1052, %v1056
    %v1060 = vadd.f32 %v1053, %v1057
    %v1061 = vadd.f32 %v1054, %v1058
    %v1062 = vand.u32 2147483647, %v1059
    %vm1063 = vcmp.le.f32.partialorder %v1062, 0.7853982
    %vm1064 = vcmp.lt.s32.totalorder %v1059, 0
    %v1065 = vand.u32 %v1059, 2139095040
    %v1066 = vshrl.u32 %v1065, 23
    %v1067 = vsub.s32 %v1066, 127
    %v1068 = vand.u32 2147483647, %v1059
    %v1069 = vand.u32 %v1068, 8388607
    %v1070 = vor.u32 %v1069, 8388608
    %v1071 = vsub.s32 0, %v1070
    %v1072 = vadd.s32 %v1067, 1
    %vm1073 = vcmp.gt.s32.totalorder %v1072, 0
    %v1074 = vsel %vm1073, %v1072, 0
    %v1075 = vshrl.u32 %v1074, 5
    %v1076 = vand.u32 %v1074, 31
    %v1077 = vsub.s32 32, %v1076
    %v1078 = vshrl.u32 683565275, %v1077
    %v1079 = vshll.u32 683565275, %v1076
    %v1080 = vshrl.u32 2475754826, %v1077
    %v1081 = vor.u32 %v1079, %v1080
    %v1082 = vshll.u32 2475754826, %v1076
    %v1083 = vshrl.u32 2131351028, %v1077
    %v1084 = vor.u32 %v1082, %v1083
    %v1085 = vshll.u32 2131351028, %v1076
    %v1086 = vshrl.u32 2102212464, %v1077
    %v1087 = vor.u32 %v1085, %v1086
    %v1088 = vshll.u32 2102212464, %v1076
    %v1089 = vshrl.u32 920167782, %v1077
    %v1090 = vor.u32 %v1088, %v1089
    %v1091 = vshll.u32 920167782, %v1076
    %v1092 = vshrl.u32 1326507024, %v1077
    %v1093 = vor.u32 %v1091, %v1092
    %vm1094 = vcmp.lt.s32.totalorder %v1075, 1
    %vm1095 = vcmp.lt.s32.totalorder %v1075, 2
    %vm1096 = vcmp.lt.s32.totalorder %v1075, 3
    %vm1097 = vcmp.lt.s32.totalorder %v1075, 4
    %v1098 = vsel %vm1094, %v1078, %v1081
    %v1099 = vsel %vm1097, %v1087, 2102212464
    %v1100 = vsel %vm1096, %v1084, %v1099
    %v1101 = vsel %vm1095, %v1098, %v1100
    %v1102 = vsel %vm1094, %v1081, %v1084
    %v1103 = vsel %vm1097, %v1090, 920167782
    %v1104 = vsel %vm1096, %v1087, %v1103
    %v1105 = vsel %vm1095, %v1102, %v1104
    %v1106 = vsel %vm1094, %v1084, %v1087
    %v1107 = vsel %vm1097, %v1093, 1326507024
    %v1108 = vsel %vm1096, %v1090, %v1107
    %v1109 = vsel %vm1095, %v1106, %v1108
    %v1110 = vshll.u32 %v1070, 8
    %v1111 = vmul.u32.u64.compose %v1110, %v1109
    %v1112 = vextract.low.u32 %v1111
    %v1113 = vextract.high.u32 %v1111
    %v1114 = vmul.u32.u64.compose %v1110, %v1105
    %v1115 = vextract.low.u32 %v1114
    %v1116 = vextract.high.u32 %v1114
    %v1117 = vmul.u32 %v1110, %v1101
    %v1118 = vadd.s32 %v1113, %v1115
    %vm1119 = vc.u32 %v1113, %v1115
    %v1120 = vadd.s32 %v1116, 1
    %v1121 = vsel %vm1119, %v1120, %v1116
    %v1122 = vadd.s32 %v1117, %v1121
    %v1123 = vadd.s32 %v1122, 536870912
    %v1124 = vshrl.u32 %v1123, 30
    %v1125 = vshll.u32 %v1124, 30
    %v1126 = vsub.s32 %v1122, %v1125
    %vm1127 = vcmp.lt.s32.totalorder %v1126, 0
    %v1128 = vsub.s32 0, %v1126
    %v1129 = vsel %vm1127, %v1128, %v1126
    %v1130 = vclz %v1129
    %v1131 = vsub.s32 %v1130, 2
    %vm1132 = vcmp.gt.s32.totalorder 0, %v1131
    %v1133 = vsel %vm1132, 0, %v1131
    %v1134 = vsub.s32 32, %v1133
    %v1135 = vshll.u32 %v1126, %v1133
    %v1136 = vshrl.u32 %v1118, %v1134
    %v1137 = vor.u32 %v1135, %v1136
    %v1138 = vsub.s32 4294967266, %v1133
    %v1139 = vadd.s32 %v1138, 127
    %v1140 = vshll.u32 %v1139, 23
    %v1141 = vor.u32 4788187, %v1140
    %v1142 = vand.u32 2147483647, %v1141
    %v1144 = vcvt.s32.f32 %v1137
    %v1145 = vmul.f32 %v1144, %v1142
    %v1146 = vxor.u32 %v1145, 2147483648
    %v1147 = vsel %vm1064, %v1146, %v1145
    %v1148 = vsub.s32 4, %v1124
    %v1149 = vsel %vm1064, %v1148, %v1124
    %v1150 = vsel %vm1063, %v1059, %v1147
    %v1151 = vsel %vm1063, 0, %v1149
    %v1152 = vcosq.f32.pop %v1150
    %v1153 = vsinq.f32.pop %v1150
    %vm1154 = vweird.f32 %v1059
    %v1155 = vadd.s32 %v1151, 3
    %v1156 = vand.u32 %v1155, 3
    %vm1157 = vcmp.lt.s32.totalorder %v1156, 2
    %vm1158 = vcmp.eq.s32.totalorder %v1156, 0
    %v1159 = vxor.u32 %v1153, 2147483648
    %v1160 = vsel %vm1158, %v1152, %v1159
    %vm1161 = vcmp.eq.s32.totalorder %v1156, 2
    %v1162 = vxor.u32 %v1152, 2147483648
    %v1163 = vsel %vm1161, %v1162, %v1153
    %v1164 = vsel %vm1157, %v1160, %v1163
    %v1165 = vsel %vm1154, nan, %v1164
    %v1166 = vand.u32 2147483647, %v1060
    %vm1167 = vcmp.le.f32.partialorder %v1166, 0.7853982
    %vm1168 = vcmp.lt.s32.totalorder %v1060, 0
    %v1169 = vand.u32 %v1060, 2139095040
    %v1170 = vshrl.u32 %v1169, 23
    %v1171 = vsub.s32 %v1170, 127
    %v1172 = vand.u32 2147483647, %v1060
    %v1173 = vand.u32 %v1172, 8388607
    %v1174 = vor.u32 %v1173, 8388608
    %v1175 = vsub.s32 0, %v1174
    %v1176 = vadd.s32 %v1171, 1
    %vm1177 = vcmp.gt.s32.totalorder %v1176, 0
    %v1178 = vsel %vm1177, %v1176, 0
    %v1179 = vshrl.u32 %v1178, 5
    %v1180 = vand.u32 %v1178, 31
    %v1181 = vsub.s32 32, %v1180
    %v1182 = vshrl.u32 683565275, %v1181
    %v1183 = vshll.u32 683565275, %v1180
    %v1184 = vshrl.u32 2475754826, %v1181
    %v1185 = vor.u32 %v1183, %v1184
    %v1186 = vshll.u32 2475754826, %v1180
    %v1187 = vshrl.u32 2131351028, %v1181
    %v1188 = vor.u32 %v1186, %v1187
    %v1189 = vshll.u32 2131351028, %v1180
    %v1190 = vshrl.u32 2102212464, %v1181
    %v1191 = vor.u32 %v1189, %v1190
    %v1192 = vshll.u32 2102212464, %v1180
    %v1193 = vshrl.u32 920167782, %v1181
    %v1194 = vor.u32 %v1192, %v1193
    %v1195 = vshll.u32 920167782, %v1180
    %v1196 = vshrl.u32 1326507024, %v1181
    %v1197 = vor.u32 %v1195, %v1196
    %vm1198 = vcmp.lt.s32.totalorder %v1179, 1
    %vm1199 = vcmp.lt.s32.totalorder %v1179, 2
    %vm1200 = vcmp.lt.s32.totalorder %v1179, 3
    %vm1201 = vcmp.lt.s32.totalorder %v1179, 4
    %v1202 = vsel %vm1198, %v1182, %v1185
    %v1203 = vsel %vm1201, %v1191, 2102212464
    %v1204 = vsel %vm1200, %v1188, %v1203
    %v1205 = vsel %vm1199, %v1202, %v1204
    %v1206 = vsel %vm1198, %v1185, %v1188
    %v1207 = vsel %vm1201, %v1194, 920167782
    %v1208 = vsel %vm1200, %v1191, %v1207
    %v1209 = vsel %vm1199, %v1206, %v1208
    %v1210 = vsel %vm1198, %v1188, %v1191
    %v1211 = vsel %vm1201, %v1197, 1326507024
    %v1212 = vsel %vm1200, %v1194, %v1211
    %v1213 = vsel %vm1199, %v1210, %v1212
    %v1214 = vshll.u32 %v1174, 8
    %v1215 = vmul.u32.u64.compose %v1214, %v1213
    %v1216 = vextract.low.u32 %v1215
    %v1217 = vextract.high.u32 %v1215
    %v1218 = vmul.u32.u64.compose %v1214, %v1209
    %v1219 = vextract.low.u32 %v1218
    %v1220 = vextract.high.u32 %v1218
    %v1221 = vmul.u32 %v1214, %v1205
    %v1222 = vadd.s32 %v1217, %v1219
    %vm1223 = vc.u32 %v1217, %v1219
    %v1224 = vadd.s32 %v1220, 1
    %v1225 = vsel %vm1223, %v1224, %v1220
    %v1226 = vadd.s32 %v1221, %v1225
    %v1227 = vadd.s32 %v1226, 536870912
    %v1228 = vshrl.u32 %v1227, 30
    %v1229 = vshll.u32 %v1228, 30
    %v1230 = vsub.s32 %v1226, %v1229
    %vm1231 = vcmp.lt.s32.totalorder %v1230, 0
    %v1232 = vsub.s32 0, %v1230
    %v1233 = vsel %vm1231, %v1232, %v1230
    %v1234 = vclz %v1233
    %v1235 = vsub.s32 %v1234, 2
    %vm1236 = vcmp.gt.s32.totalorder 0, %v1235
    %v1237 = vsel %vm1236, 0, %v1235
    %v1238 = vsub.s32 32, %v1237
    %v1239 = vshll.u32 %v1230, %v1237
    %v1240 = vshrl.u32 %v1222, %v1238
    %v1241 = vor.u32 %v1239, %v1240
    %v1242 = vsub.s32 4294967266, %v1237
    %v1243 = vadd.s32 %v1242, 127
    %v1244 = vshll.u32 %v1243, 23
    %v1245 = vor.u32 4788187, %v1244
    %v1246 = vand.u32 2147483647, %v1245
    %v1248 = vcvt.s32.f32 %v1241
    %v1249 = vmul.f32 %v1248, %v1246
    %v1250 = vxor.u32 %v1249, 2147483648
    %v1251 = vsel %vm1168, %v1250, %v1249
    %v1252 = vsub.s32 4, %v1228
    %v1253 = vsel %vm1168, %v1252, %v1228
    %v1254 = vsel %vm1167, %v1060, %v1251
    %v1255 = vsel %vm1167, 0, %v1253
    %v1256 = vcosq.f32.pop %v1254
    %v1257 = vsinq.f32.pop %v1254
    %vm1258 = vweird.f32 %v1060
    %v1259 = vadd.s32 %v1255, 3
    %v1260 = vand.u32 %v1259, 3
    %vm1261 = vcmp.lt.s32.totalorder %v1260, 2
    %vm1262 = vcmp.eq.s32.totalorder %v1260, 0
    %v1263 = vxor.u32 %v1257, 2147483648
    %v1264 = vsel %vm1262, %v1256, %v1263
    %vm1265 = vcmp.eq.s32.totalorder %v1260, 2
    %v1266 = vxor.u32 %v1256, 2147483648
    %v1267 = vsel %vm1265, %v1266, %v1257
    %v1268 = vsel %vm1261, %v1264, %v1267
    %v1269 = vsel %vm1258, nan, %v1268
    %v1270 = vand.u32 2147483647, %v1061
    %vm1271 = vcmp.le.f32.partialorder %v1270, 0.7853982
    %vm1272 = vcmp.lt.s32.totalorder %v1061, 0
    %v1273 = vand.u32 %v1061, 2139095040
    %v1274 = vshrl.u32 %v1273, 23
    %v1275 = vsub.s32 %v1274, 127
    %v1276 = vand.u32 2147483647, %v1061
    %v1277 = vand.u32 %v1276, 8388607
    %v1278 = vor.u32 %v1277, 8388608
    %v1279 = vsub.s32 0, %v1278
    %v1280 = vadd.s32 %v1275, 1
    %vm1281 = vcmp.gt.s32.totalorder %v1280, 0
    %v1282 = vsel %vm1281, %v1280, 0
    %v1283 = vshrl.u32 %v1282, 5
    %v1284 = vand.u32 %v1282, 31
    %v1285 = vsub.s32 32, %v1284
    %v1286 = vshrl.u32 683565275, %v1285
    %v1287 = vshll.u32 683565275, %v1284
    %v1288 = vshrl.u32 2475754826, %v1285
    %v1289 = vor.u32 %v1287, %v1288
    %v1290 = vshll.u32 2475754826, %v1284
    %v1291 = vshrl.u32 2131351028, %v1285
    %v1292 = vor.u32 %v1290, %v1291
    %v1293 = vshll.u32 2131351028, %v1284
    %v1294 = vshrl.u32 2102212464, %v1285
    %v1295 = vor.u32 %v1293, %v1294
    %v1296 = vshll.u32 2102212464, %v1284
    %v1297 = vshrl.u32 920167782, %v1285
    %v1298 = vor.u32 %v1296, %v1297
    %v1299 = vshll.u32 920167782, %v1284
    %v1300 = vshrl.u32 1326507024, %v1285
    %v1301 = vor.u32 %v1299, %v1300
    %vm1302 = vcmp.lt.s32.totalorder %v1283, 1
    %vm1303 = vcmp.lt.s32.totalorder %v1283, 2
    %vm1304 = vcmp.lt.s32.totalorder %v1283, 3
    %vm1305 = vcmp.lt.s32.totalorder %v1283, 4
    %v1306 = vsel %vm1302, %v1286, %v1289
    %v1307 = vsel %vm1305, %v1295, 2102212464
    %v1308 = vsel %vm1304, %v1292, %v1307
    %v1309 = vsel %vm1303, %v1306, %v1308
    %v1310 = vsel %vm1302, %v1289, %v1292
    %v1311 = vsel %vm1305, %v1298, 920167782
    %v1312 = vsel %vm1304, %v1295, %v1311
    %v1313 = vsel %vm1303, %v1310, %v1312
    %v1314 = vsel %vm1302, %v1292, %v1295
    %v1315 = vsel %vm1305, %v1301, 1326507024
    %v1316 = vsel %vm1304, %v1298, %v1315
    %v1317 = vsel %vm1303, %v1314, %v1316
    %v1318 = vshll.u32 %v1278, 8
    %v1319 = vmul.u32.u64.compose %v1318, %v1317
    %v1320 = vextract.low.u32 %v1319
    %v1321 = vextract.high.u32 %v1319
    %v1322 = vmul.u32.u64.compose %v1318, %v1313
    %v1323 = vextract.low.u32 %v1322
    %v1324 = vextract.high.u32 %v1322
    %v1325 = vmul.u32 %v1318, %v1309
    %v1326 = vadd.s32 %v1321, %v1323
    %vm1327 = vc.u32 %v1321, %v1323
    %v1328 = vadd.s32 %v1324, 1
    %v1329 = vsel %vm1327, %v1328, %v1324
    %v1330 = vadd.s32 %v1325, %v1329
    %v1331 = vadd.s32 %v1330, 536870912
    %v1332 = vshrl.u32 %v1331, 30
    %v1333 = vshll.u32 %v1332, 30
    %v1334 = vsub.s32 %v1330, %v1333
    %vm1335 = vcmp.lt.s32.totalorder %v1334, 0
    %v1336 = vsub.s32 0, %v1334
    %v1337 = vsel %vm1335, %v1336, %v1334
    %v1338 = vclz %v1337
    %v1339 = vsub.s32 %v1338, 2
    %vm1340 = vcmp.gt.s32.totalorder 0, %v1339
    %v1341 = vsel %vm1340, 0, %v1339
    %v1342 = vsub.s32 32, %v1341
    %v1343 = vshll.u32 %v1334, %v1341
    %v1344 = vshrl.u32 %v1326, %v1342
    %v1345 = vor.u32 %v1343, %v1344
    %v1346 = vsub.s32 4294967266, %v1341
    %v1347 = vadd.s32 %v1346, 127
    %v1348 = vshll.u32 %v1347, 23
    %v1349 = vor.u32 4788187, %v1348
    %v1350 = vand.u32 2147483647, %v1349
    %v1352 = vcvt.s32.f32 %v1345
    %v1353 = vmul.f32 %v1352, %v1350
    %v1354 = vxor.u32 %v1353, 2147483648
    %v1355 = vsel %vm1272, %v1354, %v1353
    %v1356 = vsub.s32 4, %v1332
    %v1357 = vsel %vm1272, %v1356, %v1332
    %v1358 = vsel %vm1271, %v1061, %v1355
    %v1359 = vsel %vm1271, 0, %v1357
    %v1360 = vcosq.f32.pop %v1358
    %v1361 = vsinq.f32.pop %v1358
    %vm1362 = vweird.f32 %v1061
    %v1363 = vadd.s32 %v1359, 3
    %v1364 = vand.u32 %v1363, 3
    %vm1365 = vcmp.lt.s32.totalorder %v1364, 2
    %vm1366 = vcmp.eq.s32.totalorder %v1364, 0
    %v1367 = vxor.u32 %v1361, 2147483648
    %v1368 = vsel %vm1366, %v1360, %v1367
    %vm1369 = vcmp.eq.s32.totalorder %v1364, 2
    %v1370 = vxor.u32 %v1360, 2147483648
    %v1371 = vsel %vm1369, %v1370, %v1361
    %v1372 = vsel %vm1365, %v1368, %v1371
    %v1373 = vsel %vm1362, nan, %v1372
    %1374 = vrot.lane.b32.xlu0 %v733, 32
    %v1375 = vpop.permute.xlu0 %1374
    %1376 = vrot.lane.b32.xlu0 %v837, 32
    %v1377 = vpop.permute.xlu0 %1376
    %1378 = vrot.lane.b32.xlu0 %v941, 32
    %v1379 = vpop.permute.xlu0 %1378
    %1386 = vrot.lane.b32.xlu0 %v1165, 64
    %v1387 = vpop.permute.xlu0 %1386
    %1388 = vrot.lane.b32.xlu0 %v1269, 64
    %v1389 = vpop.permute.xlu0 %1388
    %1390 = vrot.lane.b32.xlu0 %v1373, 64
    %v1391 = vpop.permute.xlu0 %1390
    %v1395 = vsel %vm520, %v300, %v1375
    %v1396 = vsel %vm520, %v404, %v1377
    %v1397 = vsel %vm520, %v508, %v1379
    %vm1398 = vcmask 523264
    %v1399 = vsel %vm1398, %v1395, %v1387
    %v1400 = vsel %vm1398, %v1396, %v1389
    %v1401 = vsel %vm1398, %v1397, %v1391
    %vm1402 = vcmask 785408
    %v1403 = vsel %vm1402, %v1399, 0.0
    %v1404 = vsel %vm1402, %v1400, 0.0
    %v1405 = vsel %vm1402, %v1401, 0.0
    %1406 = vst [vmem:[#allocation8] sm:$0xff] %v1403
    %1407 = vst [vmem:[#allocation8 + $0x8] sm:$0xff] %v1404
    %1408 = vst [vmem:[#allocation8 + $0x10] sm:$0xff] %v1405
    // Predicated region
    $region50: #{tpu_custom_call.1} parent=1 // pred_check
      _
    $region51: #{tpu_custom_call.1} parent=1 // pred_check_branch
      %1410 = sbr.rel (0) target = $region53
    $region52: #{tpu_custom_call.1} parent=1 // pred_region
      %s1412 = ssub.s32 384, 384
      %1413 = vsyncadd [#allocation4], %s1412
      %s1414 = sshll.u32 [#allocation8], 4
      %s1415 = int_to_ptr.vmem [resolvable:$true] %s1414
      %1420 = dma.vmem_to_hbm [thread:$0]  %s1415, 384, %s9, [#allocation4], 128, 128, 8
    $region53: #{tpu_custom_call.1} parent=1 // pred_fallthru
      _
    // Predicated region
    $region54: #{tpu_custom_call.1} parent=1 // pred_check
      _
    $region55: #{tpu_custom_call.1} parent=1 // pred_check_branch
      %1422 = sbr.rel (0) target = $region57
    $region56: #{tpu_custom_call.1} parent=1 // pred_region
      %1423 = dma.done [#allocation4], 384
    $region57: #{tpu_custom_call.1} parent=1 // pred_fallthru
      _
    %1424 = vsyncpa [#allocation3], 1
    %1425 = vsyncpa [#allocation6], 1
    %1426 = vsyncpa [#allocation4], 1

</llo_original>
